<compile_context>
chip_gen: v5e
topology: v5e:2x2
jax: 0.10.0
libtpu: 0.0.40
codegen_flags: <defaults>
</compile_context>

<pallas_src>
import functools

import jax
import jax.numpy as jnp
from jax.experimental import pallas as pl
from jax.experimental.pallas import tpu as pltpu


# ----------------------------------------------------------------------------
# Fused Pallas kernel: LN1 -> GAU-LN -> linears -> relu^2 attention -> proj
# ----------------------------------------------------------------------------
def _block_gau_kernel(x_ref, g1_ref, b1_ref, g2_ref, b2_ref,
                      wv_ref, bv_ref, wg_ref, bg_ref,
                      wkv_ref, bkv_ref,
                      gq_ref, bq_ref, gk_ref, bk_ref,
                      wp_ref, bp_ref, o_ref, *, inv_n, eps1, eps2):
    x = x_ref[0]                                       # (N, C) f32

    def _ln(t, g, b, eps):
        mu = jnp.mean(t, axis=-1, keepdims=True)
        tc = t - mu
        var = jnp.mean(tc * tc, axis=-1, keepdims=True)  # biased, like PyTorch LN
        return tc * jax.lax.rsqrt(var + eps) * g + b

    n = _ln(x, g1_ref[...], b1_ref[...], eps1)         # Block.norm1
    m = _ln(n, g2_ref[...], b2_ref[...], eps2)         # New_GAU.norm
    m_bf = m.astype(jnp.bfloat16)

    def _mm(a_bf, w_ref, b_ref):
        # bf16 operands on the MXU, f32 accumulation; bias add in f32.
        return jnp.dot(a_bf, w_ref[...],
                       preferred_element_type=jnp.float32) + b_ref[...]

    def _silu(t):  # f32 elementwise (exp goes to the EUP slot)
        return t * (1.0 / (1.0 + jnp.exp(-t)))

    v = _silu(_mm(m_bf, wv_ref, bv_ref))               # (N, C)
    gate = _silu(_mm(m_bf, wg_ref, bg_ref))            # (N, C)

    z = _mm(m_bf, wkv_ref, bkv_ref)                    # (N, C)
    q = z * gq_ref[...] + bq_ref[...]
    k = z * gk_ref[...] + bk_ref[...]

    # attn = v @ q^T / N  (contract the channel axis of both operands)
    attn = jax.lax.dot_general(
        v.astype(jnp.bfloat16), q.astype(jnp.bfloat16),
        (((1,), (1,)), ((), ())),
        preferred_element_type=jnp.float32) * inv_n    # (N, N)
    a = jnp.maximum(attn, 0.0)
    a = a * a                                          # relu(attn) ** 2

    vo = jnp.dot(a.astype(jnp.bfloat16), k.astype(jnp.bfloat16),
                 preferred_element_type=jnp.float32)   # (N, C)

    out = jnp.dot((vo * gate).astype(jnp.bfloat16), wp_ref[...],
                  preferred_element_type=jnp.float32) + bp_ref[...]

    # Block residual: x + (proj_out + LN1(x))
    o_ref[0] = (x + n + out).astype(o_ref.dtype)


def block_forward(x, p, H, W):
    """x: (B, N, C) tokens; returns (B, N, C).  sr_ratio == 1 path."""
    B, N, C = x.shape
    assert H * W == N, (H, W, N)
    bf = jnp.bfloat16
    kernel = functools.partial(_block_gau_kernel,
                               inv_n=1.0 / N, eps1=1e-6, eps2=1e-5)

    def vec_spec():
        return pl.BlockSpec((1, C), lambda b: (0, 0))

    def mat_spec():
        return pl.BlockSpec((C, C), lambda b: (0, 0))

    return pl.pallas_call(
        kernel,
        out_shape=jax.ShapeDtypeStruct((B, N, C), jnp.float32),
        grid=(B,),
        in_specs=[
            pl.BlockSpec((1, N, C), lambda b: (b, 0, 0)),    # x
            vec_spec(), vec_spec(),                          # LN1 gamma / beta
            vec_spec(), vec_spec(),                          # GAU-LN gamma / beta
            mat_spec(), vec_spec(),                          # Wv, bv
            mat_spec(), vec_spec(),                          # Wg, bg
            mat_spec(), vec_spec(),                          # Wkv, bkv
            vec_spec(), vec_spec(), vec_spec(), vec_spec(),  # q/k gamma, beta
            mat_spec(), vec_spec(),                          # Wp, bp
        ],
        out_specs=pl.BlockSpec((1, N, C), lambda b: (b, 0, 0)),
        compiler_params=pltpu.CompilerParams(
            dimension_semantics=("parallel",),
            vmem_limit_bytes=64 * 1024 * 1024,
        ),
    )(x.astype(jnp.float32),
      p["g1"], p["b1"], p["g2"], p["b2"],
      p["wv"].astype(bf), p["bv"],
      p["wg"].astype(bf), p["bg"],
      p["wkv"].astype(bf), p["bkv"],
      p["qk_gamma"][0:1], p["qk_beta"][0:1],
      p["qk_gamma"][1:2], p["qk_beta"][1:2],
      p["wp"].astype(bf), p["bp"])


# ----------------------------------------------------------------------------
# Parameters & pure-JAX reference
# ----------------------------------------------------------------------------
def init_params(key, dim):
    ks = jax.random.split(key, 14)
    nrm = jax.random.normal
    p = {}
    p["g1"] = 1.0 + 0.1 * nrm(ks[0], (1, dim), jnp.float32)
    p["b1"] = 0.1 * nrm(ks[1], (1, dim), jnp.float32)
    p["g2"] = 1.0 + 0.1 * nrm(ks[2], (1, dim), jnp.float32)
    p["b2"] = 0.1 * nrm(ks[3], (1, dim), jnp.float32)
    p["wv"] = 0.3 * nrm(ks[4], (dim, dim), jnp.float32)
    p["bv"] = 0.05 * nrm(ks[5], (1, dim), jnp.float32)
    p["wg"] = 0.3 * nrm(ks[6], (dim, dim), jnp.float32)
    p["bg"] = 0.05 * nrm(ks[7], (1, dim), jnp.float32)
    p["wkv"] = 0.3 * nrm(ks[8], (dim, dim), jnp.float32)
    p["bkv"] = 0.05 * nrm(ks[9], (1, dim), jnp.float32)
    p["qk_gamma"] = 1.0 + 0.02 * nrm(ks[10], (2, dim), jnp.float32)
    p["qk_beta"] = 0.02 * nrm(ks[11], (2, dim), jnp.float32)
    p["wp"] = 0.1 * nrm(ks[12], (dim, dim), jnp.float32)
    p["bp"] = 0.05 * nrm(ks[13], (1, dim), jnp.float32)
    return p


def ref_forward(x, p):
    def ln(t, g, b, eps):
        mu = jnp.mean(t, axis=-1, keepdims=True)
        var = jnp.mean((t - mu) ** 2, axis=-1, keepdims=True)
        return (t - mu) / jnp.sqrt(var + eps) * g + b

    N = x.shape[1]
    n = ln(x, p["g1"], p["b1"], 1e-6)
    m = ln(n, p["g2"], p["b2"], 1e-5)
    hv = m @ p["wv"] + p["bv"]
    hg = m @ p["wg"] + p["bg"]
    v = hv * jax.nn.sigmoid(hv)
    gate = hg * jax.nn.sigmoid(hg)
    z = m @ p["wkv"] + p["bkv"]
    q = z * p["qk_gamma"][0] + p["qk_beta"][0]
    k = z * p["qk_gamma"][1] + p["qk_beta"][1]
    attn = jnp.einsum("bnc,bmc->bnm", v, q) / N
    a = jnp.maximum(attn, 0.0) ** 2
    vo = jnp.einsum("bnm,bmc->bnc", a, k)
    out = (vo * gate) @ p["wp"] + p["bp"]
    return x + n + out


if __name__ == "__main__":
    key = jax.random.PRNGKey(0)
    kx, kp = jax.random.split(key)
    B, H, W, dim = 2, 8, 8, 32          # N = H*W = 64 tokens
    N = H * W
    x = jax.random.normal(kx, (B, N, dim), jnp.float32)
    params = init_params(kp, dim)

    y = block_forward(x, params, H, W)
    y = jax.block_until_ready(y)
    assert y.shape == (B, N, dim), y.shape

    y_ref = ref_forward(x, params)
    if not jnp.allclose(y, y_ref, atol=3e-2, rtol=3e-2):
        raise RuntimeError(
            "mismatch vs reference, max abs diff = %e"
            % float(jnp.max(jnp.abs(y - y_ref)))
        )
    print("KERNEL_OK")
</pallas_src>

<mosaic_0001>
module attributes {stable_mosaic.version = 11 : i64} {
  func.func @_block_gau_kernel(%arg0: i32, %arg1: memref<1x64x32xf32, #tpu.memory_space<vmem>>, %arg2: memref<1x32xf32, #tpu.memory_space<vmem>>, %arg3: memref<1x32xf32, #tpu.memory_space<vmem>>, %arg4: memref<1x32xf32, #tpu.memory_space<vmem>>, %arg5: memref<1x32xf32, #tpu.memory_space<vmem>>, %arg6: memref<32x32xbf16, #tpu.memory_space<vmem>>, %arg7: memref<1x32xf32, #tpu.memory_space<vmem>>, %arg8: memref<32x32xbf16, #tpu.memory_space<vmem>>, %arg9: memref<1x32xf32, #tpu.memory_space<vmem>>, %arg10: memref<32x32xbf16, #tpu.memory_space<vmem>>, %arg11: memref<1x32xf32, #tpu.memory_space<vmem>>, %arg12: memref<1x32xf32, #tpu.memory_space<vmem>>, %arg13: memref<1x32xf32, #tpu.memory_space<vmem>>, %arg14: memref<1x32xf32, #tpu.memory_space<vmem>>, %arg15: memref<1x32xf32, #tpu.memory_space<vmem>>, %arg16: memref<32x32xbf16, #tpu.memory_space<vmem>>, %arg17: memref<1x32xf32, #tpu.memory_space<vmem>>, %arg18: memref<1x64x32xf32, #tpu.memory_space<vmem>>) attributes {dimension_semantics = [#tpu.dimension_semantics<parallel>], iteration_bounds = array<i64: 2>, scalar_prefetch = 0 : i64, scratch_operands = 0 : i64, tpu.core_type = #tpu.core_type<tc>, window_params = [{transform_indices = @transform_0, window_bounds = array<i64: 1, 64, 32>}, {pipeline_mode = #tpu.pipeline_mode<synchronous>, transform_indices = @transform_1, window_bounds = array<i64: 1, 32>}, {pipeline_mode = #tpu.pipeline_mode<synchronous>, transform_indices = @transform_2, window_bounds = array<i64: 1, 32>}, {pipeline_mode = #tpu.pipeline_mode<synchronous>, transform_indices = @transform_3, window_bounds = array<i64: 1, 32>}, {pipeline_mode = #tpu.pipeline_mode<synchronous>, transform_indices = @transform_4, window_bounds = array<i64: 1, 32>}, {pipeline_mode = #tpu.pipeline_mode<synchronous>, transform_indices = @transform_5, window_bounds = array<i64: 32, 32>}, {pipeline_mode = #tpu.pipeline_mode<synchronous>, transform_indices = @transform_6, window_bounds = array<i64: 1, 32>}, {pipeline_mode = #tpu.pipeline_mode<synchronous>, transform_indices = @transform_7, window_bounds = array<i64: 32, 32>}, {pipeline_mode = #tpu.pipeline_mode<synchronous>, transform_indices = @transform_8, window_bounds = array<i64: 1, 32>}, {pipeline_mode = #tpu.pipeline_mode<synchronous>, transform_indices = @transform_9, window_bounds = array<i64: 32, 32>}, {pipeline_mode = #tpu.pipeline_mode<synchronous>, transform_indices = @transform_10, window_bounds = array<i64: 1, 32>}, {pipeline_mode = #tpu.pipeline_mode<synchronous>, transform_indices = @transform_11, window_bounds = array<i64: 1, 32>}, {pipeline_mode = #tpu.pipeline_mode<synchronous>, transform_indices = @transform_12, window_bounds = array<i64: 1, 32>}, {pipeline_mode = #tpu.pipeline_mode<synchronous>, transform_indices = @transform_13, window_bounds = array<i64: 1, 32>}, {pipeline_mode = #tpu.pipeline_mode<synchronous>, transform_indices = @transform_14, window_bounds = array<i64: 1, 32>}, {pipeline_mode = #tpu.pipeline_mode<synchronous>, transform_indices = @transform_15, window_bounds = array<i64: 32, 32>}, {pipeline_mode = #tpu.pipeline_mode<synchronous>, transform_indices = @transform_16, window_bounds = array<i64: 1, 32>}, {transform_indices = @transform_17, window_bounds = array<i64: 1, 64, 32>}]} {
    %c0 = arith.constant 0 : index
    %c0_0 = arith.constant 0 : index
    %c0_1 = arith.constant 0 : index
    %0 = vector.load %arg1[%c0, %c0_0, %c0_1] : memref<1x64x32xf32, #tpu.memory_space<vmem>>, vector<1x64x32xf32>
    %1 = vector.shape_cast %0 : vector<1x64x32xf32> to vector<64x32xf32>
    %c0_2 = arith.constant 0 : index
    %c0_3 = arith.constant 0 : index
    %2 = vector.load %arg2[%c0_2, %c0_3] : memref<1x32xf32, #tpu.memory_space<vmem>>, vector<1x32xf32>
    %c0_4 = arith.constant 0 : index
    %c0_5 = arith.constant 0 : index
    %3 = vector.load %arg3[%c0_4, %c0_5] : memref<1x32xf32, #tpu.memory_space<vmem>>, vector<1x32xf32>
    %cst = arith.constant dense<0.000000e+00> : vector<64xf32>
    %4 = vector.multi_reduction <add>, %1, %cst [1] : vector<64x32xf32> to vector<64xf32>
    %5 = vector.shape_cast %4 : vector<64xf32> to vector<64x1xf32>
    %cst_6 = arith.constant 3.200000e+01 : f32
    %6 = vector.broadcast %cst_6 : f32 to vector<64x1xf32>
    %7 = arith.divf %5, %6 : vector<64x1xf32>
    %8 = vector.broadcast %7 : vector<64x1xf32> to vector<64x32xf32>
    %9 = arith.subf %1, %8 : vector<64x32xf32>
    %10 = arith.mulf %9, %9 : vector<64x32xf32>
    %cst_7 = arith.constant dense<0.000000e+00> : vector<64xf32>
    %11 = vector.multi_reduction <add>, %10, %cst_7 [1] : vector<64x32xf32> to vector<64xf32>
    %12 = vector.shape_cast %11 : vector<64xf32> to vector<64x1xf32>
    %cst_8 = arith.constant 3.200000e+01 : f32
    %13 = vector.broadcast %cst_8 : f32 to vector<64x1xf32>
    %14 = arith.divf %12, %13 : vector<64x1xf32>
    %cst_9 = arith.constant 9.99999997E-7 : f32
    %15 = vector.broadcast %cst_9 : f32 to vector<64x1xf32>
    %16 = arith.addf %14, %15 : vector<64x1xf32>
    %17 = math.rsqrt %16 : vector<64x1xf32>
    %18 = vector.broadcast %17 : vector<64x1xf32> to vector<64x32xf32>
    %19 = arith.mulf %9, %18 : vector<64x32xf32>
    %20 = vector.broadcast %2 : vector<1x32xf32> to vector<64x32xf32>
    %21 = arith.mulf %19, %20 : vector<64x32xf32>
    %22 = vector.broadcast %3 : vector<1x32xf32> to vector<64x32xf32>
    %23 = arith.addf %21, %22 : vector<64x32xf32>
    %c0_10 = arith.constant 0 : index
    %c0_11 = arith.constant 0 : index
    %24 = vector.load %arg4[%c0_10, %c0_11] : memref<1x32xf32, #tpu.memory_space<vmem>>, vector<1x32xf32>
    %c0_12 = arith.constant 0 : index
    %c0_13 = arith.constant 0 : index
    %25 = vector.load %arg5[%c0_12, %c0_13] : memref<1x32xf32, #tpu.memory_space<vmem>>, vector<1x32xf32>
    %cst_14 = arith.constant dense<0.000000e+00> : vector<64xf32>
    %26 = vector.multi_reduction <add>, %23, %cst_14 [1] : vector<64x32xf32> to vector<64xf32>
    %27 = vector.shape_cast %26 : vector<64xf32> to vector<64x1xf32>
    %cst_15 = arith.constant 3.200000e+01 : f32
    %28 = vector.broadcast %cst_15 : f32 to vector<64x1xf32>
    %29 = arith.divf %27, %28 : vector<64x1xf32>
    %30 = vector.broadcast %29 : vector<64x1xf32> to vector<64x32xf32>
    %31 = arith.subf %23, %30 : vector<64x32xf32>
    %32 = arith.mulf %31, %31 : vector<64x32xf32>
    %cst_16 = arith.constant dense<0.000000e+00> : vector<64xf32>
    %33 = vector.multi_reduction <add>, %32, %cst_16 [1] : vector<64x32xf32> to vector<64xf32>
    %34 = vector.shape_cast %33 : vector<64xf32> to vector<64x1xf32>
    %cst_17 = arith.constant 3.200000e+01 : f32
    %35 = vector.broadcast %cst_17 : f32 to vector<64x1xf32>
    %36 = arith.divf %34, %35 : vector<64x1xf32>
    %cst_18 = arith.constant 9.99999974E-6 : f32
    %37 = vector.broadcast %cst_18 : f32 to vector<64x1xf32>
    %38 = arith.addf %36, %37 : vector<64x1xf32>
    %39 = math.rsqrt %38 : vector<64x1xf32>
    %40 = vector.broadcast %39 : vector<64x1xf32> to vector<64x32xf32>
    %41 = arith.mulf %31, %40 : vector<64x32xf32>
    %42 = vector.broadcast %24 : vector<1x32xf32> to vector<64x32xf32>
    %43 = arith.mulf %41, %42 : vector<64x32xf32>
    %44 = vector.broadcast %25 : vector<1x32xf32> to vector<64x32xf32>
    %45 = arith.addf %43, %44 : vector<64x32xf32>
    %46 = arith.truncf %45 : vector<64x32xf32> to vector<64x32xbf16>
    %c0_19 = arith.constant 0 : index
    %c0_20 = arith.constant 0 : index
    %47 = vector.load %arg6[%c0_19, %c0_20] : memref<32x32xbf16, #tpu.memory_space<vmem>>, vector<32x32xbf16>
    %cst_21 = arith.constant dense<0.000000e+00> : vector<64x32xf32>
    %48 = tpu.matmul %46, %47, %cst_21 {dimension_numbers = #tpu.dot_dimension_numbers<[1], [0], [0], [1], [0, 0, 1, 1], [], []>} : vector<64x32xbf16>, vector<32x32xbf16>, vector<64x32xf32> -> vector<64x32xf32>
    %c0_22 = arith.constant 0 : index
    %c0_23 = arith.constant 0 : index
    %49 = vector.load %arg7[%c0_22, %c0_23] : memref<1x32xf32, #tpu.memory_space<vmem>>, vector<1x32xf32>
    %50 = vector.broadcast %49 : vector<1x32xf32> to vector<64x32xf32>
    %51 = arith.addf %48, %50 : vector<64x32xf32>
    %cst_24 = arith.constant 0.000000e+00 : f32
    %52 = vector.broadcast %cst_24 : f32 to vector<64x32xf32>
    %53 = arith.subf %52, %51 : vector<64x32xf32>
    %54 = math.exp %53 : vector<64x32xf32>
    %cst_25 = arith.constant 1.000000e+00 : f32
    %55 = vector.broadcast %cst_25 : f32 to vector<64x32xf32>
    %56 = arith.addf %55, %54 : vector<64x32xf32>
    %cst_26 = arith.constant 1.000000e+00 : f32
    %57 = vector.broadcast %cst_26 : f32 to vector<64x32xf32>
    %58 = arith.divf %57, %56 : vector<64x32xf32>
    %59 = arith.mulf %51, %58 : vector<64x32xf32>
    %c0_27 = arith.constant 0 : index
    %c0_28 = arith.constant 0 : index
    %60 = vector.load %arg8[%c0_27, %c0_28] : memref<32x32xbf16, #tpu.memory_space<vmem>>, vector<32x32xbf16>
    %cst_29 = arith.constant dense<0.000000e+00> : vector<64x32xf32>
    %61 = tpu.matmul %46, %60, %cst_29 {dimension_numbers = #tpu.dot_dimension_numbers<[1], [0], [0], [1], [0, 0, 1, 1], [], []>} : vector<64x32xbf16>, vector<32x32xbf16>, vector<64x32xf32> -> vector<64x32xf32>
    %c0_30 = arith.constant 0 : index
    %c0_31 = arith.constant 0 : index
    %62 = vector.load %arg9[%c0_30, %c0_31] : memref<1x32xf32, #tpu.memory_space<vmem>>, vector<1x32xf32>
    %63 = vector.broadcast %62 : vector<1x32xf32> to vector<64x32xf32>
    %64 = arith.addf %61, %63 : vector<64x32xf32>
    %cst_32 = arith.constant 0.000000e+00 : f32
    %65 = vector.broadcast %cst_32 : f32 to vector<64x32xf32>
    %66 = arith.subf %65, %64 : vector<64x32xf32>
    %67 = math.exp %66 : vector<64x32xf32>
    %cst_33 = arith.constant 1.000000e+00 : f32
    %68 = vector.broadcast %cst_33 : f32 to vector<64x32xf32>
    %69 = arith.addf %68, %67 : vector<64x32xf32>
    %cst_34 = arith.constant 1.000000e+00 : f32
    %70 = vector.broadcast %cst_34 : f32 to vector<64x32xf32>
    %71 = arith.divf %70, %69 : vector<64x32xf32>
    %72 = arith.mulf %64, %71 : vector<64x32xf32>
    %c0_35 = arith.constant 0 : index
    %c0_36 = arith.constant 0 : index
    %73 = vector.load %arg10[%c0_35, %c0_36] : memref<32x32xbf16, #tpu.memory_space<vmem>>, vector<32x32xbf16>
    %cst_37 = arith.constant dense<0.000000e+00> : vector<64x32xf32>
    %74 = tpu.matmul %46, %73, %cst_37 {dimension_numbers = #tpu.dot_dimension_numbers<[1], [0], [0], [1], [0, 0, 1, 1], [], []>} : vector<64x32xbf16>, vector<32x32xbf16>, vector<64x32xf32> -> vector<64x32xf32>
    %c0_38 = arith.constant 0 : index
    %c0_39 = arith.constant 0 : index
    %75 = vector.load %arg11[%c0_38, %c0_39] : memref<1x32xf32, #tpu.memory_space<vmem>>, vector<1x32xf32>
    %76 = vector.broadcast %75 : vector<1x32xf32> to vector<64x32xf32>
    %77 = arith.addf %74, %76 : vector<64x32xf32>
    %c0_40 = arith.constant 0 : index
    %c0_41 = arith.constant 0 : index
    %78 = vector.load %arg12[%c0_40, %c0_41] : memref<1x32xf32, #tpu.memory_space<vmem>>, vector<1x32xf32>
    %79 = vector.broadcast %78 : vector<1x32xf32> to vector<64x32xf32>
    %80 = arith.mulf %77, %79 : vector<64x32xf32>
    %c0_42 = arith.constant 0 : index
    %c0_43 = arith.constant 0 : index
    %81 = vector.load %arg13[%c0_42, %c0_43] : memref<1x32xf32, #tpu.memory_space<vmem>>, vector<1x32xf32>
    %82 = vector.broadcast %81 : vector<1x32xf32> to vector<64x32xf32>
    %83 = arith.addf %80, %82 : vector<64x32xf32>
    %c0_44 = arith.constant 0 : index
    %c0_45 = arith.constant 0 : index
    %84 = vector.load %arg14[%c0_44, %c0_45] : memref<1x32xf32, #tpu.memory_space<vmem>>, vector<1x32xf32>
    %85 = vector.broadcast %84 : vector<1x32xf32> to vector<64x32xf32>
    %86 = arith.mulf %77, %85 : vector<64x32xf32>
    %c0_46 = arith.constant 0 : index
    %c0_47 = arith.constant 0 : index
    %87 = vector.load %arg15[%c0_46, %c0_47] : memref<1x32xf32, #tpu.memory_space<vmem>>, vector<1x32xf32>
    %88 = vector.broadcast %87 : vector<1x32xf32> to vector<64x32xf32>
    %89 = arith.addf %86, %88 : vector<64x32xf32>
    %90 = arith.truncf %59 : vector<64x32xf32> to vector<64x32xbf16>
    %91 = arith.truncf %83 : vector<64x32xf32> to vector<64x32xbf16>
    %cst_48 = arith.constant dense<0.000000e+00> : vector<64x64xf32>
    %92 = tpu.matmul %90, %91, %cst_48 {dimension_numbers = #tpu.dot_dimension_numbers<[1], [1], [0], [0], [0, 0, 1, 0], [], []>} : vector<64x32xbf16>, vector<64x32xbf16>, vector<64x64xf32> -> vector<64x64xf32>
    %cst_49 = arith.constant 1.562500e-02 : f32
    %93 = vector.broadcast %cst_49 : f32 to vector<64x64xf32>
    %94 = arith.mulf %92, %93 : vector<64x64xf32>
    %cst_50 = arith.constant 0.000000e+00 : f32
    %95 = vector.broadcast %cst_50 : f32 to vector<64x64xf32>
    %96 = arith.maximumf %94, %95 : vector<64x64xf32>
    %97 = arith.mulf %96, %96 : vector<64x64xf32>
    %98 = arith.truncf %97 : vector<64x64xf32> to vector<64x64xbf16>
    %99 = arith.truncf %89 : vector<64x32xf32> to vector<64x32xbf16>
    %cst_51 = arith.constant dense<0.000000e+00> : vector<64x32xf32>
    %100 = tpu.matmul %98, %99, %cst_51 {dimension_numbers = #tpu.dot_dimension_numbers<[1], [0], [0], [1], [0, 0, 1, 1], [], []>} : vector<64x64xbf16>, vector<64x32xbf16>, vector<64x32xf32> -> vector<64x32xf32>
    %101 = arith.mulf %100, %72 : vector<64x32xf32>
    %102 = arith.truncf %101 : vector<64x32xf32> to vector<64x32xbf16>
    %c0_52 = arith.constant 0 : index
    %c0_53 = arith.constant 0 : index
    %103 = vector.load %arg16[%c0_52, %c0_53] : memref<32x32xbf16, #tpu.memory_space<vmem>>, vector<32x32xbf16>
    %cst_54 = arith.constant dense<0.000000e+00> : vector<64x32xf32>
    %104 = tpu.matmul %102, %103, %cst_54 {dimension_numbers = #tpu.dot_dimension_numbers<[1], [0], [0], [1], [0, 0, 1, 1], [], []>} : vector<64x32xbf16>, vector<32x32xbf16>, vector<64x32xf32> -> vector<64x32xf32>
    %c0_55 = arith.constant 0 : index
    %c0_56 = arith.constant 0 : index
    %105 = vector.load %arg17[%c0_55, %c0_56] : memref<1x32xf32, #tpu.memory_space<vmem>>, vector<1x32xf32>
    %106 = vector.broadcast %105 : vector<1x32xf32> to vector<64x32xf32>
    %107 = arith.addf %104, %106 : vector<64x32xf32>
    %108 = arith.addf %1, %23 : vector<64x32xf32>
    %109 = arith.addf %108, %107 : vector<64x32xf32>
    %c0_57 = arith.constant 0 : index
    %c0_58 = arith.constant 0 : index
    %c0_59 = arith.constant 0 : index
    %110 = vector.load %arg18[%c0_57, %c0_58, %c0_59] : memref<1x64x32xf32, #tpu.memory_space<vmem>>, vector<1x64x32xf32>
    %111 = vector.shape_cast %110 : vector<1x64x32xf32> to vector<64x32xf32>
    %112 = vector.shape_cast %109 : vector<64x32xf32> to vector<1x64x32xf32>
    tpu.vector_store %arg18[%c0_57, %c0_58, %c0_59], %112 {strides = array<i32>} : memref<1x64x32xf32, #tpu.memory_space<vmem>>, vector<1x64x32xf32>,
    return
  }
  func.func @transform_0(%arg0: i32) -> (i32, i32, i32) {
    %c0_i32 = arith.constant 0 : i32
    %c0_i32_0 = arith.constant 0 : i32
    %c0_i32_1 = arith.constant 0 : i32
    return %arg0, %c0_i32, %c0_i32_0 : i32, i32, i32
  }
  func.func @transform_1(%arg0: i32) -> (i32, i32) {
    %c0_i32 = arith.constant 0 : i32
    %c0_i32_0 = arith.constant 0 : i32
    %c0_i32_1 = arith.constant 0 : i32
    return %c0_i32, %c0_i32_0 : i32, i32
  }
  func.func @transform_2(%arg0: i32) -> (i32, i32) {
    %c0_i32 = arith.constant 0 : i32
    %c0_i32_0 = arith.constant 0 : i32
    %c0_i32_1 = arith.constant 0 : i32
    return %c0_i32, %c0_i32_0 : i32, i32
  }
  func.func @transform_3(%arg0: i32) -> (i32, i32) {
    %c0_i32 = arith.constant 0 : i32
    %c0_i32_0 = arith.constant 0 : i32
    %c0_i32_1 = arith.constant 0 : i32
    return %c0_i32, %c0_i32_0 : i32, i32
  }
  func.func @transform_4(%arg0: i32) -> (i32, i32) {
    %c0_i32 = arith.constant 0 : i32
    %c0_i32_0 = arith.constant 0 : i32
    %c0_i32_1 = arith.constant 0 : i32
    return %c0_i32, %c0_i32_0 : i32, i32
  }
  func.func @transform_5(%arg0: i32) -> (i32, i32) {
    %c0_i32 = arith.constant 0 : i32
    %c0_i32_0 = arith.constant 0 : i32
    %c0_i32_1 = arith.constant 0 : i32
    return %c0_i32, %c0_i32_0 : i32, i32
  }
  func.func @transform_6(%arg0: i32) -> (i32, i32) {
    %c0_i32 = arith.constant 0 : i32
    %c0_i32_0 = arith.constant 0 : i32
    %c0_i32_1 = arith.constant 0 : i32
    return %c0_i32, %c0_i32_0 : i32, i32
  }
  func.func @transform_7(%arg0: i32) -> (i32, i32) {
    %c0_i32 = arith.constant 0 : i32
    %c0_i32_0 = arith.constant 0 : i32
    %c0_i32_1 = arith.constant 0 : i32
    return %c0_i32, %c0_i32_0 : i32, i32
  }
  func.func @transform_8(%arg0: i32) -> (i32, i32) {
    %c0_i32 = arith.constant 0 : i32
    %c0_i32_0 = arith.constant 0 : i32
    %c0_i32_1 = arith.constant 0 : i32
    return %c0_i32, %c0_i32_0 : i32, i32
  }
  func.func @transform_9(%arg0: i32) -> (i32, i32) {
    %c0_i32 = arith.constant 0 : i32
    %c0_i32_0 = arith.constant 0 : i32
    %c0_i32_1 = arith.constant 0 : i32
    return %c0_i32, %c0_i32_0 : i32, i32
  }
  func.func @transform_10(%arg0: i32) -> (i32, i32) {
    %c0_i32 = arith.constant 0 : i32
    %c0_i32_0 = arith.constant 0 : i32
    %c0_i32_1 = arith.constant 0 : i32
    return %c0_i32, %c0_i32_0 : i32, i32
  }
  func.func @transform_11(%arg0: i32) -> (i32, i32) {
    %c0_i32 = arith.constant 0 : i32
    %c0_i32_0 = arith.constant 0 : i32
    %c0_i32_1 = arith.constant 0 : i32
    return %c0_i32, %c0_i32_0 : i32, i32
  }
  func.func @transform_12(%arg0: i32) -> (i32, i32) {
    %c0_i32 = arith.constant 0 : i32
    %c0_i32_0 = arith.constant 0 : i32
    %c0_i32_1 = arith.constant 0 : i32
    return %c0_i32, %c0_i32_0 : i32, i32
  }
  func.func @transform_13(%arg0: i32) -> (i32, i32) {
    %c0_i32 = arith.constant 0 : i32
    %c0_i32_0 = arith.constant 0 : i32
    %c0_i32_1 = arith.constant 0 : i32
    return %c0_i32, %c0_i32_0 : i32, i32
  }
  func.func @transform_14(%arg0: i32) -> (i32, i32) {
    %c0_i32 = arith.constant 0 : i32
    %c0_i32_0 = arith.constant 0 : i32
    %c0_i32_1 = arith.constant 0 : i32
    return %c0_i32, %c0_i32_0 : i32, i32
  }
  func.func @transform_15(%arg0: i32) -> (i32, i32) {
    %c0_i32 = arith.constant 0 : i32
    %c0_i32_0 = arith.constant 0 : i32
    %c0_i32_1 = arith.constant 0 : i32
    return %c0_i32, %c0_i32_0 : i32, i32
  }
  func.func @transform_16(%arg0: i32) -> (i32, i32) {
    %c0_i32 = arith.constant 0 : i32
    %c0_i32_0 = arith.constant 0 : i32
    %c0_i32_1 = arith.constant 0 : i32
    return %c0_i32, %c0_i32_0 : i32, i32
  }
  func.func @transform_17(%arg0: i32) -> (i32, i32, i32) {
    %c0_i32 = arith.constant 0 : i32
    %c0_i32_0 = arith.constant 0 : i32
    %c0_i32_1 = arith.constant 0 : i32
    return %arg0, %c0_i32, %c0_i32_0 : i32, i32, i32
  }
}

</mosaic_0001>

<llo_original>
// kernel: tpu_custom_call.1
$region0: #{tpu_custom_call.1}
  #allocation0 [shape = 'u32[]', space=smem, size = 0x4, offset = 0x4, fixed_abs, tag = 'smem constant byte address 0x4 - core index']
  #allocation1 [shape = 'u32[72,128]{1,0:T(1,128)}', space=vmem, size = 0x9000, scoped, tag = 'internal scratch']
  %s0 = inlined_call_operand.vmem [shape: f32[2,64,32], index: 0, kind: input, shape index: {}]
  %s1 = inlined_call_operand.vmem [shape: f32[1,32], index: 1, kind: input, shape index: {}]
  %s2 = inlined_call_operand.vmem [shape: f32[1,32], index: 2, kind: input, shape index: {}]
  %s3 = inlined_call_operand.vmem [shape: f32[1,32], index: 3, kind: input, shape index: {}]
  %s4 = inlined_call_operand.vmem [shape: f32[1,32], index: 4, kind: input, shape index: {}]
  %s5 = inlined_call_operand.vmem [shape: bf16[32,32], index: 5, kind: input, shape index: {}]
  %s6 = inlined_call_operand.vmem [shape: f32[1,32], index: 6, kind: input, shape index: {}]
  %s7 = inlined_call_operand.vmem [shape: bf16[32,32], index: 7, kind: input, shape index: {}]
  %s8 = inlined_call_operand.vmem [shape: f32[1,32], index: 8, kind: input, shape index: {}]
  %s9 = inlined_call_operand.vmem [shape: bf16[32,32], index: 9, kind: input, shape index: {}]
  %s10 = inlined_call_operand.vmem [shape: f32[1,32], index: 10, kind: input, shape index: {}]
  %s11 = inlined_call_operand.vmem [shape: f32[1,32], index: 11, kind: input, shape index: {}]
  %s12 = inlined_call_operand.vmem [shape: f32[1,32], index: 12, kind: input, shape index: {}]
  %s13 = inlined_call_operand.vmem [shape: f32[1,32], index: 13, kind: input, shape index: {}]
  %s14 = inlined_call_operand.vmem [shape: f32[1,32], index: 14, kind: input, shape index: {}]
  %s15 = inlined_call_operand.vmem [shape: bf16[32,32], index: 15, kind: input, shape index: {}]
  %s16 = inlined_call_operand.vmem [shape: f32[1,32], index: 16, kind: input, shape index: {}]
  %s17 = inlined_call_operand.vmem [shape: f32[2,64,32], index: 17, kind: output, shape index: {}]
  %s18 = sld [smem:[#allocation0]]
  $region101: #{tpu_custom_call.1} parent=0
    _
  %s20 = ssub.s32 1, %s18
  %s21 = scalar_select 0, %s20, %s18
  loop: start=0, step=1, limit=4
  $region2: #{tpu_custom_call.1} parent=0 // loop_pre_header
    _
  $region3: #{tpu_custom_call.1} parent=0 // loop_header
    %s23 = sphi 0, %s27
    %p24 = scmp.ge.s32.totalorder %s23, 4
    %s33 = sphi 0, %s35
    %s36 = sphi 0, %s33
    %s37 = sphi 0, %s36
    %s53 = sphi 0, %s37
    %s57 = sphi 0, %s57
    %s59 = sphi 0, %s57
    %s60 = sphi 0, %s59
    %s74 = sphi 0, %s60
    %s78 = sphi 0, %s78
    %s80 = sphi 0, %s78
    %s81 = sphi 0, %s80
    %s95 = sphi 0, %s81
    %s99 = sphi 0, %s99
    %s101 = sphi 0, %s99
    %s102 = sphi 0, %s101
    %s116 = sphi 0, %s102
    %s120 = sphi 0, %s120
    %s122 = sphi 0, %s120
    %s123 = sphi 0, %s122
    %s137 = sphi 0, %s123
    %s141 = sphi 0, %s141
    %s143 = sphi 0, %s141
    %s144 = sphi 0, %s143
    %s158 = sphi 0, %s144
    %s162 = sphi 0, %s162
    %s164 = sphi 0, %s162
    %s165 = sphi 0, %s164
    %s179 = sphi 0, %s165
    %s183 = sphi 0, %s183
    %s185 = sphi 0, %s183
    %s186 = sphi 0, %s185
    %s200 = sphi 0, %s186
    %s204 = sphi 0, %s204
    %s206 = sphi 0, %s204
    %s207 = sphi 0, %s206
    %s221 = sphi 0, %s207
    %s225 = sphi 0, %s225
    %s227 = sphi 0, %s225
    %s228 = sphi 0, %s227
    %s242 = sphi 0, %s228
    %s246 = sphi 0, %s246
    %s248 = sphi 0, %s246
    %s249 = sphi 0, %s248
    %s263 = sphi 0, %s249
    %s267 = sphi 0, %s267
    %s269 = sphi 0, %s267
    %s270 = sphi 0, %s269
    %s284 = sphi 0, %s270
    %s288 = sphi 0, %s288
    %s290 = sphi 0, %s288
    %s291 = sphi 0, %s290
    %s305 = sphi 0, %s291
    %s309 = sphi 0, %s309
    %s311 = sphi 0, %s309
    %s312 = sphi 0, %s311
    %s326 = sphi 0, %s312
    %s330 = sphi 0, %s330
    %s332 = sphi 0, %s330
    %s333 = sphi 0, %s332
    %s347 = sphi 0, %s333
    %s351 = sphi 0, %s351
    %s353 = sphi 0, %s351
    %s354 = sphi 0, %s353
    %s368 = sphi 0, %s354
    %s372 = sphi 0, %s372
    %s374 = sphi 0, %s372
    %s375 = sphi 0, %s374
    %s389 = sphi 0, %s375
    %s395 = sphi 0, %s397
    %s398 = sphi 0, %s395
    %s399 = sphi 0, %s398
    %s415 = sphi 0, %s399
  $region4: #{tpu_custom_call.1} parent=0 // loop_header_branch
    %26 = sbr.rel (%p24) target = $region8
  $region5: #{tpu_custom_call.1} parent=0 // loop_body
    %s28 = ssub.s32 %s23, 1
    %s29 = ssub.s32 %s23, 2
    %s30 = sadd.s32 %s23, 1
    %s31 = ssub.s32 %s23, %s30
    %p32 = scmp.eq.s32.totalorder %s31, 0
    %s34 = sadd.s32 %s33, 1
    %s35 = scalar_select %p32, %s33, %s34
    %p38 = pneg %p32
    %p39 = scmp.eq.s32.totalorder %s23, 1
    %p40 = por %p38, %p39
    %p41 = scmp.ne.s32.totalorder %s33, %s36
    %p42 = scmp.eq.s32.totalorder %s23, 0
    %p43 = por %p41, %p42
    %p44 = scmp.ne.s32.totalorder %s33, %s36
    %p45 = scmp.eq.s32.totalorder %s28, 1
    %p46 = por %p44, %p45
    %p47 = scmp.ne.s32.totalorder %s36, %s37
    %p48 = scmp.eq.s32.totalorder %s28, 0
    %p49 = por %p47, %p48
    %p50 = scmp.ne.s32.totalorder %s36, %s37
    %p51 = scmp.eq.s32.totalorder %s29, 1
    %p52 = por %p50, %p51
    %p54 = scmp.ne.s32.totalorder %s37, %s53
    %p55 = scmp.eq.s32.totalorder %s29, 0
    %p56 = por %p54, %p55
    %s58 = sadd.s32 %s57, 1
    %p61 = scmp.eq.s32.totalorder %s23, 1
    %p62 = scmp.ne.s32.totalorder %s57, %s59
    %p63 = scmp.eq.s32.totalorder %s23, 0
    %p64 = por %p62, %p63
    %p65 = scmp.ne.s32.totalorder %s57, %s59
    %p66 = scmp.eq.s32.totalorder %s28, 1
    %p67 = por %p65, %p66
    %p68 = scmp.ne.s32.totalorder %s59, %s60
    %p69 = scmp.eq.s32.totalorder %s28, 0
    %p70 = por %p68, %p69
    %p71 = scmp.ne.s32.totalorder %s59, %s60
    %p72 = scmp.eq.s32.totalorder %s29, 1
    %p73 = por %p71, %p72
    %p75 = scmp.ne.s32.totalorder %s60, %s74
    %p76 = scmp.eq.s32.totalorder %s29, 0
    %p77 = por %p75, %p76
    %s79 = sadd.s32 %s78, 1
    %p82 = scmp.eq.s32.totalorder %s23, 1
    %p83 = scmp.ne.s32.totalorder %s78, %s80
    %p84 = scmp.eq.s32.totalorder %s23, 0
    %p85 = por %p83, %p84
    %p86 = scmp.ne.s32.totalorder %s78, %s80
    %p87 = scmp.eq.s32.totalorder %s28, 1
    %p88 = por %p86, %p87
    %p89 = scmp.ne.s32.totalorder %s80, %s81
    %p90 = scmp.eq.s32.totalorder %s28, 0
    %p91 = por %p89, %p90
    %p92 = scmp.ne.s32.totalorder %s80, %s81
    %p93 = scmp.eq.s32.totalorder %s29, 1
    %p94 = por %p92, %p93
    %p96 = scmp.ne.s32.totalorder %s81, %s95
    %p97 = scmp.eq.s32.totalorder %s29, 0
    %p98 = por %p96, %p97
    %s100 = sadd.s32 %s99, 1
    %p103 = scmp.eq.s32.totalorder %s23, 1
    %p104 = scmp.ne.s32.totalorder %s99, %s101
    %p105 = scmp.eq.s32.totalorder %s23, 0
    %p106 = por %p104, %p105
    %p107 = scmp.ne.s32.totalorder %s99, %s101
    %p108 = scmp.eq.s32.totalorder %s28, 1
    %p109 = por %p107, %p108
    %p110 = scmp.ne.s32.totalorder %s101, %s102
    %p111 = scmp.eq.s32.totalorder %s28, 0
    %p112 = por %p110, %p111
    %p113 = scmp.ne.s32.totalorder %s101, %s102
    %p114 = scmp.eq.s32.totalorder %s29, 1
    %p115 = por %p113, %p114
    %p117 = scmp.ne.s32.totalorder %s102, %s116
    %p118 = scmp.eq.s32.totalorder %s29, 0
    %p119 = por %p117, %p118
    %s121 = sadd.s32 %s120, 1
    %p124 = scmp.eq.s32.totalorder %s23, 1
    %p125 = scmp.ne.s32.totalorder %s120, %s122
    %p126 = scmp.eq.s32.totalorder %s23, 0
    %p127 = por %p125, %p126
    %p128 = scmp.ne.s32.totalorder %s120, %s122
    %p129 = scmp.eq.s32.totalorder %s28, 1
    %p130 = por %p128, %p129
    %p131 = scmp.ne.s32.totalorder %s122, %s123
    %p132 = scmp.eq.s32.totalorder %s28, 0
    %p133 = por %p131, %p132
    %p134 = scmp.ne.s32.totalorder %s122, %s123
    %p135 = scmp.eq.s32.totalorder %s29, 1
    %p136 = por %p134, %p135
    %p138 = scmp.ne.s32.totalorder %s123, %s137
    %p139 = scmp.eq.s32.totalorder %s29, 0
    %p140 = por %p138, %p139
    %s142 = sadd.s32 %s141, 1
    %p145 = scmp.eq.s32.totalorder %s23, 1
    %p146 = scmp.ne.s32.totalorder %s141, %s143
    %p147 = scmp.eq.s32.totalorder %s23, 0
    %p148 = por %p146, %p147
    %p149 = scmp.ne.s32.totalorder %s141, %s143
    %p150 = scmp.eq.s32.totalorder %s28, 1
    %p151 = por %p149, %p150
    %p152 = scmp.ne.s32.totalorder %s143, %s144
    %p153 = scmp.eq.s32.totalorder %s28, 0
    %p154 = por %p152, %p153
    %p155 = scmp.ne.s32.totalorder %s143, %s144
    %p156 = scmp.eq.s32.totalorder %s29, 1
    %p157 = por %p155, %p156
    %p159 = scmp.ne.s32.totalorder %s144, %s158
    %p160 = scmp.eq.s32.totalorder %s29, 0
    %p161 = por %p159, %p160
    %s163 = sadd.s32 %s162, 1
    %p166 = scmp.eq.s32.totalorder %s23, 1
    %p167 = scmp.ne.s32.totalorder %s162, %s164
    %p168 = scmp.eq.s32.totalorder %s23, 0
    %p169 = por %p167, %p168
    %p170 = scmp.ne.s32.totalorder %s162, %s164
    %p171 = scmp.eq.s32.totalorder %s28, 1
    %p172 = por %p170, %p171
    %p173 = scmp.ne.s32.totalorder %s164, %s165
    %p174 = scmp.eq.s32.totalorder %s28, 0
    %p175 = por %p173, %p174
    %p176 = scmp.ne.s32.totalorder %s164, %s165
    %p177 = scmp.eq.s32.totalorder %s29, 1
    %p178 = por %p176, %p177
    %p180 = scmp.ne.s32.totalorder %s165, %s179
    %p181 = scmp.eq.s32.totalorder %s29, 0
    %p182 = por %p180, %p181
    %s184 = sadd.s32 %s183, 1
    %p187 = scmp.eq.s32.totalorder %s23, 1
    %p188 = scmp.ne.s32.totalorder %s183, %s185
    %p189 = scmp.eq.s32.totalorder %s23, 0
    %p190 = por %p188, %p189
    %p191 = scmp.ne.s32.totalorder %s183, %s185
    %p192 = scmp.eq.s32.totalorder %s28, 1
    %p193 = por %p191, %p192
    %p194 = scmp.ne.s32.totalorder %s185, %s186
    %p195 = scmp.eq.s32.totalorder %s28, 0
    %p196 = por %p194, %p195
    %p197 = scmp.ne.s32.totalorder %s185, %s186
    %p198 = scmp.eq.s32.totalorder %s29, 1
    %p199 = por %p197, %p198
    %p201 = scmp.ne.s32.totalorder %s186, %s200
    %p202 = scmp.eq.s32.totalorder %s29, 0
    %p203 = por %p201, %p202
    %s205 = sadd.s32 %s204, 1
    %p208 = scmp.eq.s32.totalorder %s23, 1
    %p209 = scmp.ne.s32.totalorder %s204, %s206
    %p210 = scmp.eq.s32.totalorder %s23, 0
    %p211 = por %p209, %p210
    %p212 = scmp.ne.s32.totalorder %s204, %s206
    %p213 = scmp.eq.s32.totalorder %s28, 1
    %p214 = por %p212, %p213
    %p215 = scmp.ne.s32.totalorder %s206, %s207
    %p216 = scmp.eq.s32.totalorder %s28, 0
    %p217 = por %p215, %p216
    %p218 = scmp.ne.s32.totalorder %s206, %s207
    %p219 = scmp.eq.s32.totalorder %s29, 1
    %p220 = por %p218, %p219
    %p222 = scmp.ne.s32.totalorder %s207, %s221
    %p223 = scmp.eq.s32.totalorder %s29, 0
    %p224 = por %p222, %p223
    %s226 = sadd.s32 %s225, 1
    %p229 = scmp.eq.s32.totalorder %s23, 1
    %p230 = scmp.ne.s32.totalorder %s225, %s227
    %p231 = scmp.eq.s32.totalorder %s23, 0
    %p232 = por %p230, %p231
    %p233 = scmp.ne.s32.totalorder %s225, %s227
    %p234 = scmp.eq.s32.totalorder %s28, 1
    %p235 = por %p233, %p234
    %p236 = scmp.ne.s32.totalorder %s227, %s228
    %p237 = scmp.eq.s32.totalorder %s28, 0
    %p238 = por %p236, %p237
    %p239 = scmp.ne.s32.totalorder %s227, %s228
    %p240 = scmp.eq.s32.totalorder %s29, 1
    %p241 = por %p239, %p240
    %p243 = scmp.ne.s32.totalorder %s228, %s242
    %p244 = scmp.eq.s32.totalorder %s29, 0
    %p245 = por %p243, %p244
    %s247 = sadd.s32 %s246, 1
    %p250 = scmp.eq.s32.totalorder %s23, 1
    %p251 = scmp.ne.s32.totalorder %s246, %s248
    %p252 = scmp.eq.s32.totalorder %s23, 0
    %p253 = por %p251, %p252
    %p254 = scmp.ne.s32.totalorder %s246, %s248
    %p255 = scmp.eq.s32.totalorder %s28, 1
    %p256 = por %p254, %p255
    %p257 = scmp.ne.s32.totalorder %s248, %s249
    %p258 = scmp.eq.s32.totalorder %s28, 0
    %p259 = por %p257, %p258
    %p260 = scmp.ne.s32.totalorder %s248, %s249
    %p261 = scmp.eq.s32.totalorder %s29, 1
    %p262 = por %p260, %p261
    %p264 = scmp.ne.s32.totalorder %s249, %s263
    %p265 = scmp.eq.s32.totalorder %s29, 0
    %p266 = por %p264, %p265
    %s268 = sadd.s32 %s267, 1
    %p271 = scmp.eq.s32.totalorder %s23, 1
    %p272 = scmp.ne.s32.totalorder %s267, %s269
    %p273 = scmp.eq.s32.totalorder %s23, 0
    %p274 = por %p272, %p273
    %p275 = scmp.ne.s32.totalorder %s267, %s269
    %p276 = scmp.eq.s32.totalorder %s28, 1
    %p277 = por %p275, %p276
    %p278 = scmp.ne.s32.totalorder %s269, %s270
    %p279 = scmp.eq.s32.totalorder %s28, 0
    %p280 = por %p278, %p279
    %p281 = scmp.ne.s32.totalorder %s269, %s270
    %p282 = scmp.eq.s32.totalorder %s29, 1
    %p283 = por %p281, %p282
    %p285 = scmp.ne.s32.totalorder %s270, %s284
    %p286 = scmp.eq.s32.totalorder %s29, 0
    %p287 = por %p285, %p286
    %s289 = sadd.s32 %s288, 1
    %p292 = scmp.eq.s32.totalorder %s23, 1
    %p293 = scmp.ne.s32.totalorder %s288, %s290
    %p294 = scmp.eq.s32.totalorder %s23, 0
    %p295 = por %p293, %p294
    %p296 = scmp.ne.s32.totalorder %s288, %s290
    %p297 = scmp.eq.s32.totalorder %s28, 1
    %p298 = por %p296, %p297
    %p299 = scmp.ne.s32.totalorder %s290, %s291
    %p300 = scmp.eq.s32.totalorder %s28, 0
    %p301 = por %p299, %p300
    %p302 = scmp.ne.s32.totalorder %s290, %s291
    %p303 = scmp.eq.s32.totalorder %s29, 1
    %p304 = por %p302, %p303
    %p306 = scmp.ne.s32.totalorder %s291, %s305
    %p307 = scmp.eq.s32.totalorder %s29, 0
    %p308 = por %p306, %p307
    %s310 = sadd.s32 %s309, 1
    %p313 = scmp.eq.s32.totalorder %s23, 1
    %p314 = scmp.ne.s32.totalorder %s309, %s311
    %p315 = scmp.eq.s32.totalorder %s23, 0
    %p316 = por %p314, %p315
    %p317 = scmp.ne.s32.totalorder %s309, %s311
    %p318 = scmp.eq.s32.totalorder %s28, 1
    %p319 = por %p317, %p318
    %p320 = scmp.ne.s32.totalorder %s311, %s312
    %p321 = scmp.eq.s32.totalorder %s28, 0
    %p322 = por %p320, %p321
    %p323 = scmp.ne.s32.totalorder %s311, %s312
    %p324 = scmp.eq.s32.totalorder %s29, 1
    %p325 = por %p323, %p324
    %p327 = scmp.ne.s32.totalorder %s312, %s326
    %p328 = scmp.eq.s32.totalorder %s29, 0
    %p329 = por %p327, %p328
    %s331 = sadd.s32 %s330, 1
    %p334 = scmp.eq.s32.totalorder %s23, 1
    %p335 = scmp.ne.s32.totalorder %s330, %s332
    %p336 = scmp.eq.s32.totalorder %s23, 0
    %p337 = por %p335, %p336
    %p338 = scmp.ne.s32.totalorder %s330, %s332
    %p339 = scmp.eq.s32.totalorder %s28, 1
    %p340 = por %p338, %p339
    %p341 = scmp.ne.s32.totalorder %s332, %s333
    %p342 = scmp.eq.s32.totalorder %s28, 0
    %p343 = por %p341, %p342
    %p344 = scmp.ne.s32.totalorder %s332, %s333
    %p345 = scmp.eq.s32.totalorder %s29, 1
    %p346 = por %p344, %p345
    %p348 = scmp.ne.s32.totalorder %s333, %s347
    %p349 = scmp.eq.s32.totalorder %s29, 0
    %p350 = por %p348, %p349
    %s352 = sadd.s32 %s351, 1
    %p355 = scmp.eq.s32.totalorder %s23, 1
    %p356 = scmp.ne.s32.totalorder %s351, %s353
    %p357 = scmp.eq.s32.totalorder %s23, 0
    %p358 = por %p356, %p357
    %p359 = scmp.ne.s32.totalorder %s351, %s353
    %p360 = scmp.eq.s32.totalorder %s28, 1
    %p361 = por %p359, %p360
    %p362 = scmp.ne.s32.totalorder %s353, %s354
    %p363 = scmp.eq.s32.totalorder %s28, 0
    %p364 = por %p362, %p363
    %p365 = scmp.ne.s32.totalorder %s353, %s354
    %p366 = scmp.eq.s32.totalorder %s29, 1
    %p367 = por %p365, %p366
    %p369 = scmp.ne.s32.totalorder %s354, %s368
    %p370 = scmp.eq.s32.totalorder %s29, 0
    %p371 = por %p369, %p370
    %s373 = sadd.s32 %s372, 1
    %p376 = scmp.eq.s32.totalorder %s23, 1
    %p377 = scmp.ne.s32.totalorder %s372, %s374
    %p378 = scmp.eq.s32.totalorder %s23, 0
    %p379 = por %p377, %p378
    %p380 = scmp.ne.s32.totalorder %s372, %s374
    %p381 = scmp.eq.s32.totalorder %s28, 1
    %p382 = por %p380, %p381
    %p383 = scmp.ne.s32.totalorder %s374, %s375
    %p384 = scmp.eq.s32.totalorder %s28, 0
    %p385 = por %p383, %p384
    %p386 = scmp.ne.s32.totalorder %s374, %s375
    %p387 = scmp.eq.s32.totalorder %s29, 1
    %p388 = por %p386, %p387
    %p390 = scmp.ne.s32.totalorder %s375, %s389
    %p391 = scmp.eq.s32.totalorder %s29, 0
    %p392 = por %p390, %p391
    %s393 = ssub.s32 %s23, %s30
    %p394 = scmp.eq.s32.totalorder %s393, 0
    %s396 = sadd.s32 %s395, 1
    %s397 = scalar_select %p394, %s395, %s396
    %p400 = pneg %p394
    %p401 = scmp.eq.s32.totalorder %s23, 1
    %p402 = por %p400, %p401
    %p403 = scmp.ne.s32.totalorder %s395, %s398
    %p404 = scmp.eq.s32.totalorder %s23, 0
    %p405 = por %p403, %p404
    %p406 = scmp.ne.s32.totalorder %s395, %s398
    %p407 = scmp.eq.s32.totalorder %s28, 1
    %p408 = por %p406, %p407
    %p409 = scmp.ne.s32.totalorder %s398, %s399
    %p410 = scmp.eq.s32.totalorder %s28, 0
    %p411 = por %p409, %p410
    %p412 = scmp.ne.s32.totalorder %s398, %s399
    %p413 = scmp.eq.s32.totalorder %s29, 1
    %p414 = por %p412, %p413
    %p416 = scmp.ne.s32.totalorder %s399, %s415
    %p417 = scmp.eq.s32.totalorder %s29, 0
    %p418 = por %p416, %p417
    %p419 = scmp.le.s32.totalorder 1, %s23
    %p420 = scmp.lt.s32.totalorder %s23, 3
    %p421 = pnand %p419, %p420
    %p422 = pneg %p421
    // Predicated region
    $region9: #{tpu_custom_call.1} parent=5 // pred_check
      _
    $region10: #{tpu_custom_call.1} parent=5 // pred_check_branch
      %424 = sbr.rel (%p421) target = $region12
    $region11: #{tpu_custom_call.1} parent=5 // pred_region
      %s425 = ssub.s32 %s23, 1
      // Predicated region
      $region13: #{tpu_custom_call.1} parent=11 // pred_check
        %p426 = pneg %p70
      $region14: #{tpu_custom_call.1} parent=11 // pred_check_branch
        %428 = sbr.rel (%p426) target = $region16
      $region15: #{tpu_custom_call.1} parent=11 // pred_region
        _
      $region16: #{tpu_custom_call.1} parent=11 // pred_fallthru
        _
      // Predicated region
      $region17: #{tpu_custom_call.1} parent=11 // pred_check
        %p429 = pneg %p91
      $region18: #{tpu_custom_call.1} parent=11 // pred_check_branch
        %431 = sbr.rel (%p429) target = $region20
      $region19: #{tpu_custom_call.1} parent=11 // pred_region
        _
      $region20: #{tpu_custom_call.1} parent=11 // pred_fallthru
        _
      // Predicated region
      $region21: #{tpu_custom_call.1} parent=11 // pred_check
        %p432 = pneg %p112
      $region22: #{tpu_custom_call.1} parent=11 // pred_check_branch
        %434 = sbr.rel (%p432) target = $region24
      $region23: #{tpu_custom_call.1} parent=11 // pred_region
        _
      $region24: #{tpu_custom_call.1} parent=11 // pred_fallthru
        _
      // Predicated region
      $region25: #{tpu_custom_call.1} parent=11 // pred_check
        %p435 = pneg %p133
      $region26: #{tpu_custom_call.1} parent=11 // pred_check_branch
        %437 = sbr.rel (%p435) target = $region28
      $region27: #{tpu_custom_call.1} parent=11 // pred_region
        _
      $region28: #{tpu_custom_call.1} parent=11 // pred_fallthru
        _
      // Predicated region
      $region29: #{tpu_custom_call.1} parent=11 // pred_check
        %p438 = pneg %p154
      $region30: #{tpu_custom_call.1} parent=11 // pred_check_branch
        %440 = sbr.rel (%p438) target = $region32
      $region31: #{tpu_custom_call.1} parent=11 // pred_region
        _
      $region32: #{tpu_custom_call.1} parent=11 // pred_fallthru
        _
      // Predicated region
      $region33: #{tpu_custom_call.1} parent=11 // pred_check
        %p441 = pneg %p175
      $region34: #{tpu_custom_call.1} parent=11 // pred_check_branch
        %443 = sbr.rel (%p441) target = $region36
      $region35: #{tpu_custom_call.1} parent=11 // pred_region
        _
      $region36: #{tpu_custom_call.1} parent=11 // pred_fallthru
        _
      // Predicated region
      $region37: #{tpu_custom_call.1} parent=11 // pred_check
        %p444 = pneg %p196
      $region38: #{tpu_custom_call.1} parent=11 // pred_check_branch
        %446 = sbr.rel (%p444) target = $region40
      $region39: #{tpu_custom_call.1} parent=11 // pred_region
        _
      $region40: #{tpu_custom_call.1} parent=11 // pred_fallthru
        _
      // Predicated region
      $region41: #{tpu_custom_call.1} parent=11 // pred_check
        %p447 = pneg %p217
      $region42: #{tpu_custom_call.1} parent=11 // pred_check_branch
        %449 = sbr.rel (%p447) target = $region44
      $region43: #{tpu_custom_call.1} parent=11 // pred_region
        _
      $region44: #{tpu_custom_call.1} parent=11 // pred_fallthru
        _
      // Predicated region
      $region45: #{tpu_custom_call.1} parent=11 // pred_check
        %p450 = pneg %p238
      $region46: #{tpu_custom_call.1} parent=11 // pred_check_branch
        %452 = sbr.rel (%p450) target = $region48
      $region47: #{tpu_custom_call.1} parent=11 // pred_region
        _
      $region48: #{tpu_custom_call.1} parent=11 // pred_fallthru
        _
      // Predicated region
      $region49: #{tpu_custom_call.1} parent=11 // pred_check
        %p453 = pneg %p259
      $region50: #{tpu_custom_call.1} parent=11 // pred_check_branch
        %455 = sbr.rel (%p453) target = $region52
      $region51: #{tpu_custom_call.1} parent=11 // pred_region
        _
      $region52: #{tpu_custom_call.1} parent=11 // pred_fallthru
        _
      // Predicated region
      $region53: #{tpu_custom_call.1} parent=11 // pred_check
        %p456 = pneg %p280
      $region54: #{tpu_custom_call.1} parent=11 // pred_check_branch
        %458 = sbr.rel (%p456) target = $region56
      $region55: #{tpu_custom_call.1} parent=11 // pred_region
        _
      $region56: #{tpu_custom_call.1} parent=11 // pred_fallthru
        _
      // Predicated region
      $region57: #{tpu_custom_call.1} parent=11 // pred_check
        %p459 = pneg %p301
      $region58: #{tpu_custom_call.1} parent=11 // pred_check_branch
        %461 = sbr.rel (%p459) target = $region60
      $region59: #{tpu_custom_call.1} parent=11 // pred_region
        _
      $region60: #{tpu_custom_call.1} parent=11 // pred_fallthru
        _
      // Predicated region
      $region61: #{tpu_custom_call.1} parent=11 // pred_check
        %p462 = pneg %p322
      $region62: #{tpu_custom_call.1} parent=11 // pred_check_branch
        %464 = sbr.rel (%p462) target = $region64
      $region63: #{tpu_custom_call.1} parent=11 // pred_region
        _
      $region64: #{tpu_custom_call.1} parent=11 // pred_fallthru
        _
      // Predicated region
      $region65: #{tpu_custom_call.1} parent=11 // pred_check
        %p465 = pneg %p343
      $region66: #{tpu_custom_call.1} parent=11 // pred_check_branch
        %467 = sbr.rel (%p465) target = $region68
      $region67: #{tpu_custom_call.1} parent=11 // pred_region
        _
      $region68: #{tpu_custom_call.1} parent=11 // pred_fallthru
        _
      // Predicated region
      $region69: #{tpu_custom_call.1} parent=11 // pred_check
        %p468 = pneg %p364
      $region70: #{tpu_custom_call.1} parent=11 // pred_check_branch
        %470 = sbr.rel (%p468) target = $region72
      $region71: #{tpu_custom_call.1} parent=11 // pred_region
        _
      $region72: #{tpu_custom_call.1} parent=11 // pred_fallthru
        _
      // Predicated region
      $region73: #{tpu_custom_call.1} parent=11 // pred_check
        %p471 = pneg %p385
      $region74: #{tpu_custom_call.1} parent=11 // pred_check_branch
        %473 = sbr.rel (%p471) target = $region76
      $region75: #{tpu_custom_call.1} parent=11 // pred_region
        _
      $region76: #{tpu_custom_call.1} parent=11 // pred_fallthru
        _
    $region12: #{tpu_custom_call.1} parent=5 // pred_fallthru
      _
    %p474 = scmp.lt.s32.totalorder %s23, 2
    // Predicated region
    $region77: #{tpu_custom_call.1} parent=5 // pred_check
      %p475 = pneg %p474
    $region78: #{tpu_custom_call.1} parent=5 // pred_check_branch
      %477 = sbr.rel (%p475) target = $region80
    $region79: #{tpu_custom_call.1} parent=5 // pred_region
      // Predicated region
      $region81: #{tpu_custom_call.1} parent=79 // pred_check
        %p478 = pneg %p43
      $region82: #{tpu_custom_call.1} parent=79 // pred_check_branch
        %480 = sbr.rel (%p478) target = $region84
      $region83: #{tpu_custom_call.1} parent=79 // pred_region
        %p481 = scmp.lt.s32.totalorder %s23, 1
        %s482 = scalar_select %p481, %s23, 1
        %s483 = smul.addr %s482, 8
        %s484 = smul.addr %s483, 8
        %s485 = scalar_lea.vmem %s0, %s484
      $region84: #{tpu_custom_call.1} parent=79 // pred_fallthru
        _
    $region80: #{tpu_custom_call.1} parent=5 // pred_fallthru
      _
    %p486 = scmp.le.s32.totalorder 1, %s23
    %p487 = scmp.lt.s32.totalorder %s23, 3
    %p488 = pnand %p486, %p487
    %p489 = pneg %p488
    // Predicated region
    $region85: #{tpu_custom_call.1} parent=5 // pred_check
      _
    $region86: #{tpu_custom_call.1} parent=5 // pred_check_branch
      %491 = sbr.rel (%p488) target = $region88
    $region87: #{tpu_custom_call.1} parent=5 // pred_region
      %s492 = ssub.s32 %s23, 1
      %p493 = scmp.lt.s32.totalorder %s28, 1
      %s494 = scalar_select %p493, %s28, 1
      %s495 = smul.addr %s494, 8
      %s496 = smul.addr %s495, 8
      %s497 = scalar_lea.vmem %s0, %s496
      %p498 = pneg %p49
      %p499 = pneg %p46
      %p500 = pneg %p70
      %p501 = pneg %p67
      %p502 = pneg %p91
      %p503 = pneg %p88
      %p504 = pneg %p112
      %p505 = pneg %p109
      %p506 = pneg %p133
      %p507 = pneg %p130
      %p508 = pneg %p154
      %p509 = pneg %p151
      %p510 = pneg %p175
      %p511 = pneg %p172
      %p512 = pneg %p196
      %p513 = pneg %p193
      %p514 = pneg %p217
      %p515 = pneg %p214
      %p516 = pneg %p238
      %p517 = pneg %p235
      %p518 = pneg %p259
      %p519 = pneg %p256
      %p520 = pneg %p280
      %p521 = pneg %p277
      %p522 = pneg %p301
      %p523 = pneg %p298
      %p524 = pneg %p322
      %p525 = pneg %p319
      %p526 = pneg %p343
      %p527 = pneg %p340
      %p528 = pneg %p364
      %p529 = pneg %p361
      %p530 = pneg %p385
      %p531 = pneg %p382
      %p532 = pneg %p411
      %p533 = pneg %p408
      %p534 = scmp.lt.s32.totalorder %s28, 1
      %s535 = scalar_select %p534, %s28, 1
      %s536 = smul.addr %s535, 8
      %s537 = smul.addr %s536, 8
      %s538 = scalar_lea.vmem %s17, %s537
      %p539 = scmp.lt.s32.totalorder %s28, 1
      %s540 = scalar_select %p539, %s28, 1
      %s541 = smul.addr %s540, 8
      %s542 = smul.addr %s541, 8
      %s543 = scalar_lea.vmem %s0, %s542
      %p544 = scmp.lt.s32.totalorder %s28, 1
      %s545 = scalar_select %p544, %s28, 1
      %s546 = smul.addr %s545, 8
      %s547 = smul.addr %s546, 8
      %s548 = scalar_lea.vmem %s17, %s547
      %v550 = vld [vmem:[%s543] sm:$0xff]
      %v551 = vld [vmem:[%s543 + $0x8] sm:$0xff]
      %v552 = vld [vmem:[%s543 + $0x10] sm:$0xff]
      %v553 = vld [vmem:[%s543 + $0x18] sm:$0xff]
      %v554 = vld [vmem:[%s543 + $0x20] sm:$0xff]
      %v555 = vld [vmem:[%s543 + $0x28] sm:$0xff]
      %v556 = vld [vmem:[%s543 + $0x30] sm:$0xff]
      %v557 = vld [vmem:[%s543 + $0x38] sm:$0xff]
      %v558 = vld [vmem:[%s1] sm:$0x1]
      %v559 = vld [vmem:[%s2] sm:$0x1]
      %vm560 = vcmask 261120
      %v561 = vsel %vm560, %v550, 0.0
      %562 = vadd.xlane.f32.xlu0 %v561
      %v563 = vpop.xlane.xlu0 %562
      %v564 = vsel %vm560, %v551, 0.0
      %565 = vadd.xlane.f32.xlu0 %v564
      %v566 = vpop.xlane.xlu0 %565
      %v567 = vsel %vm560, %v552, 0.0
      %568 = vadd.xlane.f32.xlu0 %v567
      %v569 = vpop.xlane.xlu0 %568
      %v570 = vsel %vm560, %v553, 0.0
      %571 = vadd.xlane.f32.xlu0 %v570
      %v572 = vpop.xlane.xlu0 %571
      %v573 = vsel %vm560, %v554, 0.0
      %574 = vadd.xlane.f32.xlu0 %v573
      %v575 = vpop.xlane.xlu0 %574
      %v576 = vsel %vm560, %v555, 0.0
      %577 = vadd.xlane.f32.xlu0 %v576
      %v578 = vpop.xlane.xlu0 %577
      %v579 = vsel %vm560, %v556, 0.0
      %580 = vadd.xlane.f32.xlu0 %v579
      %v581 = vpop.xlane.xlu0 %580
      %v582 = vsel %vm560, %v557, 0.0
      %583 = vadd.xlane.f32.xlu0 %v582
      %v584 = vpop.xlane.xlu0 %583
      %v585 = vrcp.pop 32.0
      %v586 = vmul.f32 32.0, %v585
      %v587 = vsub.f32 1.0, %v586
      %v588 = vmul.f32 %v585, %v587
      %v589 = vadd.f32 %v585, %v588
      %vm590 = vweird.f32 %v585
      %v591 = vsel %vm590, %v585, %v589
      %v592 = vmul.f32 %v563, %v591
      %v593 = vmul.f32 %v566, %v591
      %v594 = vmul.f32 %v569, %v591
      %v595 = vmul.f32 %v572, %v591
      %v596 = vmul.f32 %v575, %v591
      %v597 = vmul.f32 %v578, %v591
      %v598 = vmul.f32 %v581, %v591
      %v599 = vmul.f32 %v584, %v591
      %v600 = vsub.f32 %v550, %v592
      %v601 = vsub.f32 %v551, %v593
      %v602 = vsub.f32 %v552, %v594
      %v603 = vsub.f32 %v553, %v595
      %v604 = vsub.f32 %v554, %v596
      %v605 = vsub.f32 %v555, %v597
      %v606 = vsub.f32 %v556, %v598
      %v607 = vsub.f32 %v557, %v599
      %v608 = vmul.f32 %v600, %v600
      %v609 = vmul.f32 %v601, %v601
      %v610 = vmul.f32 %v602, %v602
      %v611 = vmul.f32 %v603, %v603
      %v612 = vmul.f32 %v604, %v604
      %v613 = vmul.f32 %v605, %v605
      %v614 = vmul.f32 %v606, %v606
      %v615 = vmul.f32 %v607, %v607
      %v616 = vsel %vm560, %v608, 0.0
      %617 = vadd.xlane.f32.xlu0 %v616
      %v618 = vpop.xlane.xlu0 %617
      %v619 = vsel %vm560, %v609, 0.0
      %620 = vadd.xlane.f32.xlu0 %v619
      %v621 = vpop.xlane.xlu0 %620
      %v622 = vsel %vm560, %v610, 0.0
      %623 = vadd.xlane.f32.xlu0 %v622
      %v624 = vpop.xlane.xlu0 %623
      %v625 = vsel %vm560, %v611, 0.0
      %626 = vadd.xlane.f32.xlu0 %v625
      %v627 = vpop.xlane.xlu0 %626
      %v628 = vsel %vm560, %v612, 0.0
      %629 = vadd.xlane.f32.xlu0 %v628
      %v630 = vpop.xlane.xlu0 %629
      %v631 = vsel %vm560, %v613, 0.0
      %632 = vadd.xlane.f32.xlu0 %v631
      %v633 = vpop.xlane.xlu0 %632
      %v634 = vsel %vm560, %v614, 0.0
      %635 = vadd.xlane.f32.xlu0 %v634
      %v636 = vpop.xlane.xlu0 %635
      %v637 = vsel %vm560, %v615, 0.0
      %638 = vadd.xlane.f32.xlu0 %v637
      %v639 = vpop.xlane.xlu0 %638
      %v640 = vmul.f32 %v618, %v591
      %v641 = vmul.f32 %v621, %v591
      %v642 = vmul.f32 %v624, %v591
      %v643 = vmul.f32 %v627, %v591
      %v644 = vmul.f32 %v630, %v591
      %v645 = vmul.f32 %v633, %v591
      %v646 = vmul.f32 %v636, %v591
      %v647 = vmul.f32 %v639, %v591
      %v648 = vadd.f32 %v640, 1e-06
      %v649 = vadd.f32 %v641, 1e-06
      %v650 = vadd.f32 %v642, 1e-06
      %v651 = vadd.f32 %v643, 1e-06
      %v652 = vadd.f32 %v644, 1e-06
      %v653 = vadd.f32 %v645, 1e-06
      %v654 = vadd.f32 %v646, 1e-06
      %v655 = vadd.f32 %v647, 1e-06
      %v656 = vrsqrt.pop %v648
      %v657 = vmul.f32 %v656, %v648
      %v658 = vmul.f32 %v657, %v656
      %v659 = vmul.f32 0.5, %v658
      %v660 = vsub.f32 1.5, %v659
      %v661 = vmul.f32 %v656, %v660
      %vm662 = vweird.f32 %v648
      %vm663 = vweird.f32 %v656
      %vm664 = vmor %vm662, %vm663
      %v665 = vsel %vm664, %v656, %v661
      %v666 = vrsqrt.pop %v649
      %v667 = vmul.f32 %v666, %v649
      %v668 = vmul.f32 %v667, %v666
      %v669 = vmul.f32 0.5, %v668
      %v670 = vsub.f32 1.5, %v669
      %v671 = vmul.f32 %v666, %v670
      %vm672 = vweird.f32 %v649
      %vm673 = vweird.f32 %v666
      %vm674 = vmor %vm672, %vm673
      %v675 = vsel %vm674, %v666, %v671
      %v676 = vrsqrt.pop %v650
      %v677 = vmul.f32 %v676, %v650
      %v678 = vmul.f32 %v677, %v676
      %v679 = vmul.f32 0.5, %v678
      %v680 = vsub.f32 1.5, %v679
      %v681 = vmul.f32 %v676, %v680
      %vm682 = vweird.f32 %v650
      %vm683 = vweird.f32 %v676
      %vm684 = vmor %vm682, %vm683
      %v685 = vsel %vm684, %v676, %v681
      %v686 = vrsqrt.pop %v651
      %v687 = vmul.f32 %v686, %v651
      %v688 = vmul.f32 %v687, %v686
      %v689 = vmul.f32 0.5, %v688
      %v690 = vsub.f32 1.5, %v689
      %v691 = vmul.f32 %v686, %v690
      %vm692 = vweird.f32 %v651
      %vm693 = vweird.f32 %v686
      %vm694 = vmor %vm692, %vm693
      %v695 = vsel %vm694, %v686, %v691
      %v696 = vrsqrt.pop %v652
      %v697 = vmul.f32 %v696, %v652
      %v698 = vmul.f32 %v697, %v696
      %v699 = vmul.f32 0.5, %v698
      %v700 = vsub.f32 1.5, %v699
      %v701 = vmul.f32 %v696, %v700
      %vm702 = vweird.f32 %v652
      %vm703 = vweird.f32 %v696
      %vm704 = vmor %vm702, %vm703
      %v705 = vsel %vm704, %v696, %v701
      %v706 = vrsqrt.pop %v653
      %v707 = vmul.f32 %v706, %v653
      %v708 = vmul.f32 %v707, %v706
      %v709 = vmul.f32 0.5, %v708
      %v710 = vsub.f32 1.5, %v709
      %v711 = vmul.f32 %v706, %v710
      %vm712 = vweird.f32 %v653
      %vm713 = vweird.f32 %v706
      %vm714 = vmor %vm712, %vm713
      %v715 = vsel %vm714, %v706, %v711
      %v716 = vrsqrt.pop %v654
      %v717 = vmul.f32 %v716, %v654
      %v718 = vmul.f32 %v717, %v716
      %v719 = vmul.f32 0.5, %v718
      %v720 = vsub.f32 1.5, %v719
      %v721 = vmul.f32 %v716, %v720
      %vm722 = vweird.f32 %v654
      %vm723 = vweird.f32 %v716
      %vm724 = vmor %vm722, %vm723
      %v725 = vsel %vm724, %v716, %v721
      %v726 = vrsqrt.pop %v655
      %v727 = vmul.f32 %v726, %v655
      %v728 = vmul.f32 %v727, %v726
      %v729 = vmul.f32 0.5, %v728
      %v730 = vsub.f32 1.5, %v729
      %v731 = vmul.f32 %v726, %v730
      %vm732 = vweird.f32 %v655
      %vm733 = vweird.f32 %v726
      %vm734 = vmor %vm732, %vm733
      %v735 = vsel %vm734, %v726, %v731
      %v736 = vmul.f32 %v600, %v665
      %v737 = vmul.f32 %v601, %v675
      %v738 = vmul.f32 %v602, %v685
      %v739 = vmul.f32 %v603, %v695
      %v740 = vmul.f32 %v604, %v705
      %v741 = vmul.f32 %v605, %v715
      %v742 = vmul.f32 %v606, %v725
      %v743 = vmul.f32 %v607, %v735
      %v745 = vperm.slane %v558, 0
      %v747 = vmul.f32 %v736, %v745
      %v748 = vmul.f32 %v737, %v745
      %v749 = vmul.f32 %v738, %v745
      %v750 = vmul.f32 %v739, %v745
      %v751 = vmul.f32 %v740, %v745
      %v752 = vmul.f32 %v741, %v745
      %v753 = vmul.f32 %v742, %v745
      %v754 = vmul.f32 %v743, %v745
      %v756 = vperm.slane %v559, 0
      %v758 = vadd.f32 %v747, %v756
      %v759 = vadd.f32 %v748, %v756
      %v760 = vadd.f32 %v749, %v756
      %v761 = vadd.f32 %v750, %v756
      %v762 = vadd.f32 %v751, %v756
      %v763 = vadd.f32 %v752, %v756
      %v764 = vadd.f32 %v753, %v756
      %v765 = vadd.f32 %v754, %v756
      %v766 = vld [vmem:[%s3] sm:$0x1]
      %v767 = vld [vmem:[%s4] sm:$0x1]
      %v768 = vsel %vm560, %v758, 0.0
      %769 = vadd.xlane.f32.xlu0 %v768
      %v770 = vpop.xlane.xlu0 %769
      %v771 = vsel %vm560, %v759, 0.0
      %772 = vadd.xlane.f32.xlu0 %v771
      %v773 = vpop.xlane.xlu0 %772
      %v774 = vsel %vm560, %v760, 0.0
      %775 = vadd.xlane.f32.xlu0 %v774
      %v776 = vpop.xlane.xlu0 %775
      %v777 = vsel %vm560, %v761, 0.0
      %778 = vadd.xlane.f32.xlu0 %v777
      %v779 = vpop.xlane.xlu0 %778
      %v780 = vsel %vm560, %v762, 0.0
      %781 = vadd.xlane.f32.xlu0 %v780
      %v782 = vpop.xlane.xlu0 %781
      %v783 = vsel %vm560, %v763, 0.0
      %784 = vadd.xlane.f32.xlu0 %v783
      %v785 = vpop.xlane.xlu0 %784
      %v786 = vsel %vm560, %v764, 0.0
      %787 = vadd.xlane.f32.xlu0 %v786
      %v788 = vpop.xlane.xlu0 %787
      %v789 = vsel %vm560, %v765, 0.0
      %790 = vadd.xlane.f32.xlu0 %v789
      %v791 = vpop.xlane.xlu0 %790
      %v792 = vmul.f32 %v770, %v591
      %v793 = vmul.f32 %v773, %v591
      %v794 = vmul.f32 %v776, %v591
      %v795 = vmul.f32 %v779, %v591
      %v796 = vmul.f32 %v782, %v591
      %v797 = vmul.f32 %v785, %v591
      %v798 = vmul.f32 %v788, %v591
      %v799 = vmul.f32 %v791, %v591
      %v800 = vsub.f32 %v758, %v792
      %v801 = vsub.f32 %v759, %v793
      %v802 = vsub.f32 %v760, %v794
      %v803 = vsub.f32 %v761, %v795
      %v804 = vsub.f32 %v762, %v796
      %v805 = vsub.f32 %v763, %v797
      %v806 = vsub.f32 %v764, %v798
      %v807 = vsub.f32 %v765, %v799
      %v808 = vmul.f32 %v800, %v800
      %v809 = vmul.f32 %v801, %v801
      %v810 = vmul.f32 %v802, %v802
      %v811 = vmul.f32 %v803, %v803
      %v812 = vmul.f32 %v804, %v804
      %v813 = vmul.f32 %v805, %v805
      %v814 = vmul.f32 %v806, %v806
      %v815 = vmul.f32 %v807, %v807
      %v816 = vsel %vm560, %v808, 0.0
      %817 = vadd.xlane.f32.xlu0 %v816
      %v818 = vpop.xlane.xlu0 %817
      %v819 = vsel %vm560, %v809, 0.0
      %820 = vadd.xlane.f32.xlu0 %v819
      %v821 = vpop.xlane.xlu0 %820
      %v822 = vsel %vm560, %v810, 0.0
      %823 = vadd.xlane.f32.xlu0 %v822
      %v824 = vpop.xlane.xlu0 %823
      %v825 = vsel %vm560, %v811, 0.0
      %826 = vadd.xlane.f32.xlu0 %v825
      %v827 = vpop.xlane.xlu0 %826
      %v828 = vsel %vm560, %v812, 0.0
      %829 = vadd.xlane.f32.xlu0 %v828
      %v830 = vpop.xlane.xlu0 %829
      %v831 = vsel %vm560, %v813, 0.0
      %832 = vadd.xlane.f32.xlu0 %v831
      %v833 = vpop.xlane.xlu0 %832
      %v834 = vsel %vm560, %v814, 0.0
      %835 = vadd.xlane.f32.xlu0 %v834
      %v836 = vpop.xlane.xlu0 %835
      %v837 = vsel %vm560, %v815, 0.0
      %838 = vadd.xlane.f32.xlu0 %v837
      %v839 = vpop.xlane.xlu0 %838
      %v840 = vmul.f32 %v818, %v591
      %v841 = vmul.f32 %v821, %v591
      %v842 = vmul.f32 %v824, %v591
      %v843 = vmul.f32 %v827, %v591
      %v844 = vmul.f32 %v830, %v591
      %v845 = vmul.f32 %v833, %v591
      %v846 = vmul.f32 %v836, %v591
      %v847 = vmul.f32 %v839, %v591
      %v848 = vadd.f32 %v840, 1e-05
      %v849 = vadd.f32 %v841, 1e-05
      %v850 = vadd.f32 %v842, 1e-05
      %v851 = vadd.f32 %v843, 1e-05
      %v852 = vadd.f32 %v844, 1e-05
      %v853 = vadd.f32 %v845, 1e-05
      %v854 = vadd.f32 %v846, 1e-05
      %v855 = vadd.f32 %v847, 1e-05
      %v856 = vrsqrt.pop %v848
      %v857 = vmul.f32 %v856, %v848
      %v858 = vmul.f32 %v857, %v856
      %v859 = vmul.f32 0.5, %v858
      %v860 = vsub.f32 1.5, %v859
      %v861 = vmul.f32 %v856, %v860
      %vm862 = vweird.f32 %v848
      %vm863 = vweird.f32 %v856
      %vm864 = vmor %vm862, %vm863
      %v865 = vsel %vm864, %v856, %v861
      %v866 = vrsqrt.pop %v849
      %v867 = vmul.f32 %v866, %v849
      %v868 = vmul.f32 %v867, %v866
      %v869 = vmul.f32 0.5, %v868
      %v870 = vsub.f32 1.5, %v869
      %v871 = vmul.f32 %v866, %v870
      %vm872 = vweird.f32 %v849
      %vm873 = vweird.f32 %v866
      %vm874 = vmor %vm872, %vm873
      %v875 = vsel %vm874, %v866, %v871
      %v876 = vrsqrt.pop %v850
      %v877 = vmul.f32 %v876, %v850
      %v878 = vmul.f32 %v877, %v876
      %v879 = vmul.f32 0.5, %v878
      %v880 = vsub.f32 1.5, %v879
      %v881 = vmul.f32 %v876, %v880
      %vm882 = vweird.f32 %v850
      %vm883 = vweird.f32 %v876
      %vm884 = vmor %vm882, %vm883
      %v885 = vsel %vm884, %v876, %v881
      %v886 = vrsqrt.pop %v851
      %v887 = vmul.f32 %v886, %v851
      %v888 = vmul.f32 %v887, %v886
      %v889 = vmul.f32 0.5, %v888
      %v890 = vsub.f32 1.5, %v889
      %v891 = vmul.f32 %v886, %v890
      %vm892 = vweird.f32 %v851
      %vm893 = vweird.f32 %v886
      %vm894 = vmor %vm892, %vm893
      %v895 = vsel %vm894, %v886, %v891
      %v896 = vrsqrt.pop %v852
      %v897 = vmul.f32 %v896, %v852
      %v898 = vmul.f32 %v897, %v896
      %v899 = vmul.f32 0.5, %v898
      %v900 = vsub.f32 1.5, %v899
      %v901 = vmul.f32 %v896, %v900
      %vm902 = vweird.f32 %v852
      %vm903 = vweird.f32 %v896
      %vm904 = vmor %vm902, %vm903
      %v905 = vsel %vm904, %v896, %v901
      %v906 = vrsqrt.pop %v853
      %v907 = vmul.f32 %v906, %v853
      %v908 = vmul.f32 %v907, %v906
      %v909 = vmul.f32 0.5, %v908
      %v910 = vsub.f32 1.5, %v909
      %v911 = vmul.f32 %v906, %v910
      %vm912 = vweird.f32 %v853
      %vm913 = vweird.f32 %v906
      %vm914 = vmor %vm912, %vm913
      %v915 = vsel %vm914, %v906, %v911
      %v916 = vrsqrt.pop %v854
      %v917 = vmul.f32 %v916, %v854
      %v918 = vmul.f32 %v917, %v916
      %v919 = vmul.f32 0.5, %v918
      %v920 = vsub.f32 1.5, %v919
      %v921 = vmul.f32 %v916, %v920
      %vm922 = vweird.f32 %v854
      %vm923 = vweird.f32 %v916
      %vm924 = vmor %vm922, %vm923
      %v925 = vsel %vm924, %v916, %v921
      %v926 = vrsqrt.pop %v855
      %v927 = vmul.f32 %v926, %v855
      %v928 = vmul.f32 %v927, %v926
      %v929 = vmul.f32 0.5, %v928
      %v930 = vsub.f32 1.5, %v929
      %v931 = vmul.f32 %v926, %v930
      %vm932 = vweird.f32 %v855
      %vm933 = vweird.f32 %v926
      %vm934 = vmor %vm932, %vm933
      %v935 = vsel %vm934, %v926, %v931
      %v936 = vmul.f32 %v800, %v865
      %v937 = vmul.f32 %v801, %v875
      %v938 = vmul.f32 %v802, %v885
      %v939 = vmul.f32 %v803, %v895
      %v940 = vmul.f32 %v804, %v905
      %v941 = vmul.f32 %v805, %v915
      %v942 = vmul.f32 %v806, %v925
      %v943 = vmul.f32 %v807, %v935
      %v945 = vperm.slane %v766, 0
      %v947 = vmul.f32 %v936, %v945
      %v948 = vmul.f32 %v937, %v945
      %v949 = vmul.f32 %v938, %v945
      %v950 = vmul.f32 %v939, %v945
      %v951 = vmul.f32 %v940, %v945
      %v952 = vmul.f32 %v941, %v945
      %v953 = vmul.f32 %v942, %v945
      %v954 = vmul.f32 %v943, %v945
      %v956 = vperm.slane %v767, 0
      %v958 = vadd.f32 %v947, %v956
      %v959 = vadd.f32 %v948, %v956
      %v960 = vadd.f32 %v949, %v956
      %v961 = vadd.f32 %v950, %v956
      %v962 = vadd.f32 %v951, %v956
      %v963 = vadd.f32 %v952, %v956
      %v964 = vadd.f32 %v953, %v956
      %v965 = vadd.f32 %v954, %v956
      %v966 = vpack.c.bf16 %v959, %v958
      %v967 = vpack.c.bf16 %v961, %v960
      %v968 = vpack.c.bf16 %v963, %v962
      %v969 = vpack.c.bf16 %v965, %v964
      %v970 = vld [vmem:[%s5] sm:$0xf]
      %v971 = vld [vmem:[%s5 + $0x4] sm:$0xf]
      %v972 = vld [vmem:[%s5 + $0x8] sm:$0xf]
      %v973 = vld [vmem:[%s5 + $0xc] sm:$0xf]
      %v974 = vld [vmem:[%s6] sm:$0x1]
      %v976 = vperm.slane %v974, 0
      %v982 = vunpack.c.l.b16 %v970
      %v983 = vunpack.c.l.b16 %v971
      %v984 = vunpack.c.l.b16 %v972
      %v985 = vunpack.c.l.b16 %v973
      %v986 = vpack.c.b16 %v983, %v982
      %v987 = vpack.c.b16 %v985, %v984
      %v991 = vsel %vm560, %v966, 0
      %v994 = vsel %vm560, %v967, 0
      %v997 = vsel %vm560, %v968, 0
      %v1000 = vsel %vm560, %v969, 0
      %1002 = vmatpush.bf16.msra.mxu0 0
      %1003 = vmatpush.bf16.msra.mxu0 0
      %1004 = vmatpush.bf16.msra.mxu0 0
      %1005 = vmatpush.bf16.msra.mxu0 0
      %1006 = vmatpush.bf16.msra.mxu0 0
      %1007 = vmatpush.bf16.msra.mxu0 0
      %1008 = vmatpush.bf16.msra.mxu0 %v987
      %1009 = vmatpush.bf16.msra.mxu0 %v986
      %1010 = vmatmul.bf16.gmra.mxu0 %v991
      %v1011 = vpop.f32.mrf.mxu0
      %v1012 = vadd.f32 %v976, %v1011
      %v1013 = vpop.f32.mrf.mxu0
      %v1014 = vadd.f32 %v976, %v1013
      %1015 = vmatmul.bf16.gmra.mxu0 %v994
      %v1016 = vpop.f32.mrf.mxu0
      %v1017 = vadd.f32 %v976, %v1016
      %v1018 = vpop.f32.mrf.mxu0
      %v1019 = vadd.f32 %v976, %v1018
      %1020 = vmatmul.bf16.gmra.mxu0 %v997
      %v1021 = vpop.f32.mrf.mxu0
      %v1022 = vadd.f32 %v976, %v1021
      %v1023 = vpop.f32.mrf.mxu0
      %v1024 = vadd.f32 %v976, %v1023
      %1025 = vmatmul.bf16.gmra.mxu0 %v1000
      %v1026 = vpop.f32.mrf.mxu0
      %v1027 = vadd.f32 %v976, %v1026
      %v1028 = vpop.f32.mrf.mxu0
      %v1029 = vadd.f32 %v976, %v1028
      %1030 = vdwg.mxu0
      %v1031 = vsub.f32 0.0, %v1012
      %v1032 = vsub.f32 0.0, %v1014
      %v1033 = vsub.f32 0.0, %v1017
      %v1034 = vsub.f32 0.0, %v1019
      %v1035 = vsub.f32 0.0, %v1022
      %v1036 = vsub.f32 0.0, %v1024
      %v1037 = vsub.f32 0.0, %v1027
      %v1038 = vsub.f32 0.0, %v1029
      %v1039 = vmul.f32 %v1031, 1.442695
      %v1040 = vpow.pop %v1039
      %v1041 = vmul.f32 %v1032, 1.442695
      %v1042 = vpow.pop %v1041
      %v1043 = vmul.f32 %v1033, 1.442695
      %v1044 = vpow.pop %v1043
      %v1045 = vmul.f32 %v1034, 1.442695
      %v1046 = vpow.pop %v1045
      %v1047 = vmul.f32 %v1035, 1.442695
      %v1048 = vpow.pop %v1047
      %v1049 = vmul.f32 %v1036, 1.442695
      %v1050 = vpow.pop %v1049
      %v1051 = vmul.f32 %v1037, 1.442695
      %v1052 = vpow.pop %v1051
      %v1053 = vmul.f32 %v1038, 1.442695
      %v1054 = vpow.pop %v1053
      %v1055 = vadd.f32 %v1040, 1.0
      %v1056 = vadd.f32 %v1042, 1.0
      %v1057 = vadd.f32 %v1044, 1.0
      %v1058 = vadd.f32 %v1046, 1.0
      %v1059 = vadd.f32 %v1048, 1.0
      %v1060 = vadd.f32 %v1050, 1.0
      %v1061 = vadd.f32 %v1052, 1.0
      %v1062 = vadd.f32 %v1054, 1.0
      %v1063 = vrcp.pop %v1055
      %v1064 = vmul.f32 %v1055, %v1063
      %v1065 = vsub.f32 1.0, %v1064
      %v1066 = vmul.f32 %v1063, %v1065
      %v1067 = vadd.f32 %v1063, %v1066
      %vm1068 = vweird.f32 %v1055
      %vm1069 = vweird.f32 %v1063
      %vm1070 = vmor %vm1068, %vm1069
      %v1071 = vsel %vm1070, %v1063, %v1067
      %v1072 = vand.u32 2147483647, %v1055
      %vm1073 = vcmp.eq.f32.partialorder %v1072, 8.507059e+37
      %v1074 = vand.u32 %v1055, 2147483648
      %v1075 = vor.u32 1.1754944e-38, %v1074
      %v1076 = vsel %vm1073, %v1075, %v1071
      %v1077 = vmul.f32 1.0, %v1076
      %v1078 = vrcp.pop %v1056
      %v1079 = vmul.f32 %v1056, %v1078
      %v1080 = vsub.f32 1.0, %v1079
      %v1081 = vmul.f32 %v1078, %v1080
      %v1082 = vadd.f32 %v1078, %v1081
      %vm1083 = vweird.f32 %v1056
      %vm1084 = vweird.f32 %v1078
      %vm1085 = vmor %vm1083, %vm1084
      %v1086 = vsel %vm1085, %v1078, %v1082
      %v1087 = vand.u32 2147483647, %v1056
      %vm1088 = vcmp.eq.f32.partialorder %v1087, 8.507059e+37
      %v1089 = vand.u32 %v1056, 2147483648
      %v1090 = vor.u32 1.1754944e-38, %v1089
      %v1091 = vsel %vm1088, %v1090, %v1086
      %v1092 = vmul.f32 1.0, %v1091
      %v1093 = vrcp.pop %v1057
      %v1094 = vmul.f32 %v1057, %v1093
      %v1095 = vsub.f32 1.0, %v1094
      %v1096 = vmul.f32 %v1093, %v1095
      %v1097 = vadd.f32 %v1093, %v1096
      %vm1098 = vweird.f32 %v1057
      %vm1099 = vweird.f32 %v1093
      %vm1100 = vmor %vm1098, %vm1099
      %v1101 = vsel %vm1100, %v1093, %v1097
      %v1102 = vand.u32 2147483647, %v1057
      %vm1103 = vcmp.eq.f32.partialorder %v1102, 8.507059e+37
      %v1104 = vand.u32 %v1057, 2147483648
      %v1105 = vor.u32 1.1754944e-38, %v1104
      %v1106 = vsel %vm1103, %v1105, %v1101
      %v1107 = vmul.f32 1.0, %v1106
      %v1108 = vrcp.pop %v1058
      %v1109 = vmul.f32 %v1058, %v1108
      %v1110 = vsub.f32 1.0, %v1109
      %v1111 = vmul.f32 %v1108, %v1110
      %v1112 = vadd.f32 %v1108, %v1111
      %vm1113 = vweird.f32 %v1058
      %vm1114 = vweird.f32 %v1108
      %vm1115 = vmor %vm1113, %vm1114
      %v1116 = vsel %vm1115, %v1108, %v1112
      %v1117 = vand.u32 2147483647, %v1058
      %vm1118 = vcmp.eq.f32.partialorder %v1117, 8.507059e+37
      %v1119 = vand.u32 %v1058, 2147483648
      %v1120 = vor.u32 1.1754944e-38, %v1119
      %v1121 = vsel %vm1118, %v1120, %v1116
      %v1122 = vmul.f32 1.0, %v1121
      %v1123 = vrcp.pop %v1059
      %v1124 = vmul.f32 %v1059, %v1123
      %v1125 = vsub.f32 1.0, %v1124
      %v1126 = vmul.f32 %v1123, %v1125
      %v1127 = vadd.f32 %v1123, %v1126
      %vm1128 = vweird.f32 %v1059
      %vm1129 = vweird.f32 %v1123
      %vm1130 = vmor %vm1128, %vm1129
      %v1131 = vsel %vm1130, %v1123, %v1127
      %v1132 = vand.u32 2147483647, %v1059
      %vm1133 = vcmp.eq.f32.partialorder %v1132, 8.507059e+37
      %v1134 = vand.u32 %v1059, 2147483648
      %v1135 = vor.u32 1.1754944e-38, %v1134
      %v1136 = vsel %vm1133, %v1135, %v1131
      %v1137 = vmul.f32 1.0, %v1136
      %v1138 = vrcp.pop %v1060
      %v1139 = vmul.f32 %v1060, %v1138
      %v1140 = vsub.f32 1.0, %v1139
      %v1141 = vmul.f32 %v1138, %v1140
      %v1142 = vadd.f32 %v1138, %v1141
      %vm1143 = vweird.f32 %v1060
      %vm1144 = vweird.f32 %v1138
      %vm1145 = vmor %vm1143, %vm1144
      %v1146 = vsel %vm1145, %v1138, %v1142
      %v1147 = vand.u32 2147483647, %v1060
      %vm1148 = vcmp.eq.f32.partialorder %v1147, 8.507059e+37
      %v1149 = vand.u32 %v1060, 2147483648
      %v1150 = vor.u32 1.1754944e-38, %v1149
      %v1151 = vsel %vm1148, %v1150, %v1146
      %v1152 = vmul.f32 1.0, %v1151
      %v1153 = vrcp.pop %v1061
      %v1154 = vmul.f32 %v1061, %v1153
      %v1155 = vsub.f32 1.0, %v1154
      %v1156 = vmul.f32 %v1153, %v1155
      %v1157 = vadd.f32 %v1153, %v1156
      %vm1158 = vweird.f32 %v1061
      %vm1159 = vweird.f32 %v1153
      %vm1160 = vmor %vm1158, %vm1159
      %v1161 = vsel %vm1160, %v1153, %v1157
      %v1162 = vand.u32 2147483647, %v1061
      %vm1163 = vcmp.eq.f32.partialorder %v1162, 8.507059e+37
      %v1164 = vand.u32 %v1061, 2147483648
      %v1165 = vor.u32 1.1754944e-38, %v1164
      %v1166 = vsel %vm1163, %v1165, %v1161
      %v1167 = vmul.f32 1.0, %v1166
      %v1168 = vrcp.pop %v1062
      %v1169 = vmul.f32 %v1062, %v1168
      %v1170 = vsub.f32 1.0, %v1169
      %v1171 = vmul.f32 %v1168, %v1170
      %v1172 = vadd.f32 %v1168, %v1171
      %vm1173 = vweird.f32 %v1062
      %vm1174 = vweird.f32 %v1168
      %vm1175 = vmor %vm1173, %vm1174
      %v1176 = vsel %vm1175, %v1168, %v1172
      %v1177 = vand.u32 2147483647, %v1062
      %vm1178 = vcmp.eq.f32.partialorder %v1177, 8.507059e+37
      %v1179 = vand.u32 %v1062, 2147483648
      %v1180 = vor.u32 1.1754944e-38, %v1179
      %v1181 = vsel %vm1178, %v1180, %v1176
      %v1182 = vmul.f32 1.0, %v1181
      %v1183 = vmul.f32 %v1012, %v1077
      %v1184 = vmul.f32 %v1014, %v1092
      %v1185 = vmul.f32 %v1017, %v1107
      %v1186 = vmul.f32 %v1019, %v1122
      %v1187 = vmul.f32 %v1022, %v1137
      %v1188 = vmul.f32 %v1024, %v1152
      %v1189 = vmul.f32 %v1027, %v1167
      %v1190 = vmul.f32 %v1029, %v1182
      %v1191 = vld [vmem:[%s7] sm:$0xf]
      %v1192 = vld [vmem:[%s7 + $0x4] sm:$0xf]
      %v1193 = vld [vmem:[%s7 + $0x8] sm:$0xf]
      %v1194 = vld [vmem:[%s7 + $0xc] sm:$0xf]
      %v1195 = vld [vmem:[%s8] sm:$0x1]
      %v1197 = vperm.slane %v1195, 0
      %v1203 = vunpack.c.l.b16 %v1191
      %v1204 = vunpack.c.l.b16 %v1192
      %v1205 = vunpack.c.l.b16 %v1193
      %v1206 = vunpack.c.l.b16 %v1194
      %v1207 = vpack.c.b16 %v1204, %v1203
      %v1208 = vpack.c.b16 %v1206, %v1205
      %1211 = vmatpush.bf16.msra.mxu0 0
      %1212 = vmatpush.bf16.msra.mxu0 0
      %1213 = vmatpush.bf16.msra.mxu0 0
      %1214 = vmatpush.bf16.msra.mxu0 0
      %1215 = vmatpush.bf16.msra.mxu0 0
      %1216 = vmatpush.bf16.msra.mxu0 0
      %1217 = vmatpush.bf16.msra.mxu0 %v1208
      %1218 = vmatpush.bf16.msra.mxu0 %v1207
      %1219 = vmatmul.bf16.gmra.mxu0 %v991
      %v1220 = vpop.f32.mrf.mxu0
      %v1221 = vadd.f32 %v1197, %v1220
      %v1222 = vpop.f32.mrf.mxu0
      %v1223 = vadd.f32 %v1197, %v1222
      %1224 = vmatmul.bf16.gmra.mxu0 %v994
      %v1225 = vpop.f32.mrf.mxu0
      %v1226 = vadd.f32 %v1197, %v1225
      %v1227 = vpop.f32.mrf.mxu0
      %v1228 = vadd.f32 %v1197, %v1227
      %1229 = vmatmul.bf16.gmra.mxu0 %v997
      %v1230 = vpop.f32.mrf.mxu0
      %v1231 = vadd.f32 %v1197, %v1230
      %v1232 = vpop.f32.mrf.mxu0
      %v1233 = vadd.f32 %v1197, %v1232
      %1234 = vmatmul.bf16.gmra.mxu0 %v1000
      %v1235 = vpop.f32.mrf.mxu0
      %v1236 = vadd.f32 %v1197, %v1235
      %v1237 = vpop.f32.mrf.mxu0
      %v1238 = vadd.f32 %v1197, %v1237
      %1239 = vdwg.mxu0
      %v1240 = vsub.f32 0.0, %v1221
      %v1241 = vsub.f32 0.0, %v1223
      %v1242 = vsub.f32 0.0, %v1226
      %v1243 = vsub.f32 0.0, %v1228
      %v1244 = vsub.f32 0.0, %v1231
      %v1245 = vsub.f32 0.0, %v1233
      %v1246 = vsub.f32 0.0, %v1236
      %v1247 = vsub.f32 0.0, %v1238
      %v1248 = vmul.f32 %v1240, 1.442695
      %v1249 = vpow.pop %v1248
      %v1250 = vmul.f32 %v1241, 1.442695
      %v1251 = vpow.pop %v1250
      %v1252 = vmul.f32 %v1242, 1.442695
      %v1253 = vpow.pop %v1252
      %v1254 = vmul.f32 %v1243, 1.442695
      %v1255 = vpow.pop %v1254
      %v1256 = vmul.f32 %v1244, 1.442695
      %v1257 = vpow.pop %v1256
      %v1258 = vmul.f32 %v1245, 1.442695
      %v1259 = vpow.pop %v1258
      %v1260 = vmul.f32 %v1246, 1.442695
      %v1261 = vpow.pop %v1260
      %v1262 = vmul.f32 %v1247, 1.442695
      %v1263 = vpow.pop %v1262
      %v1264 = vadd.f32 %v1249, 1.0
      %v1265 = vadd.f32 %v1251, 1.0
      %v1266 = vadd.f32 %v1253, 1.0
      %v1267 = vadd.f32 %v1255, 1.0
      %v1268 = vadd.f32 %v1257, 1.0
      %v1269 = vadd.f32 %v1259, 1.0
      %v1270 = vadd.f32 %v1261, 1.0
      %v1271 = vadd.f32 %v1263, 1.0
      %v1272 = vrcp.pop %v1264
      %v1273 = vmul.f32 %v1264, %v1272
      %v1274 = vsub.f32 1.0, %v1273
      %v1275 = vmul.f32 %v1272, %v1274
      %v1276 = vadd.f32 %v1272, %v1275
      %vm1277 = vweird.f32 %v1264
      %vm1278 = vweird.f32 %v1272
      %vm1279 = vmor %vm1277, %vm1278
      %v1280 = vsel %vm1279, %v1272, %v1276
      %v1281 = vand.u32 2147483647, %v1264
      %vm1282 = vcmp.eq.f32.partialorder %v1281, 8.507059e+37
      %v1283 = vand.u32 %v1264, 2147483648
      %v1284 = vor.u32 1.1754944e-38, %v1283
      %v1285 = vsel %vm1282, %v1284, %v1280
      %v1286 = vmul.f32 1.0, %v1285
      %v1287 = vrcp.pop %v1265
      %v1288 = vmul.f32 %v1265, %v1287
      %v1289 = vsub.f32 1.0, %v1288
      %v1290 = vmul.f32 %v1287, %v1289
      %v1291 = vadd.f32 %v1287, %v1290
      %vm1292 = vweird.f32 %v1265
      %vm1293 = vweird.f32 %v1287
      %vm1294 = vmor %vm1292, %vm1293
      %v1295 = vsel %vm1294, %v1287, %v1291
      %v1296 = vand.u32 2147483647, %v1265
      %vm1297 = vcmp.eq.f32.partialorder %v1296, 8.507059e+37
      %v1298 = vand.u32 %v1265, 2147483648
      %v1299 = vor.u32 1.1754944e-38, %v1298
      %v1300 = vsel %vm1297, %v1299, %v1295
      %v1301 = vmul.f32 1.0, %v1300
      %v1302 = vrcp.pop %v1266
      %v1303 = vmul.f32 %v1266, %v1302
      %v1304 = vsub.f32 1.0, %v1303
      %v1305 = vmul.f32 %v1302, %v1304
      %v1306 = vadd.f32 %v1302, %v1305
      %vm1307 = vweird.f32 %v1266
      %vm1308 = vweird.f32 %v1302
      %vm1309 = vmor %vm1307, %vm1308
      %v1310 = vsel %vm1309, %v1302, %v1306
      %v1311 = vand.u32 2147483647, %v1266
      %vm1312 = vcmp.eq.f32.partialorder %v1311, 8.507059e+37
      %v1313 = vand.u32 %v1266, 2147483648
      %v1314 = vor.u32 1.1754944e-38, %v1313
      %v1315 = vsel %vm1312, %v1314, %v1310
      %v1316 = vmul.f32 1.0, %v1315
      %v1317 = vrcp.pop %v1267
      %v1318 = vmul.f32 %v1267, %v1317
      %v1319 = vsub.f32 1.0, %v1318
      %v1320 = vmul.f32 %v1317, %v1319
      %v1321 = vadd.f32 %v1317, %v1320
      %vm1322 = vweird.f32 %v1267
      %vm1323 = vweird.f32 %v1317
      %vm1324 = vmor %vm1322, %vm1323
      %v1325 = vsel %vm1324, %v1317, %v1321
      %v1326 = vand.u32 2147483647, %v1267
      %vm1327 = vcmp.eq.f32.partialorder %v1326, 8.507059e+37
      %v1328 = vand.u32 %v1267, 2147483648
      %v1329 = vor.u32 1.1754944e-38, %v1328
      %v1330 = vsel %vm1327, %v1329, %v1325
      %v1331 = vmul.f32 1.0, %v1330
      %v1332 = vrcp.pop %v1268
      %v1333 = vmul.f32 %v1268, %v1332
      %v1334 = vsub.f32 1.0, %v1333
      %v1335 = vmul.f32 %v1332, %v1334
      %v1336 = vadd.f32 %v1332, %v1335
      %vm1337 = vweird.f32 %v1268
      %vm1338 = vweird.f32 %v1332
      %vm1339 = vmor %vm1337, %vm1338
      %v1340 = vsel %vm1339, %v1332, %v1336
      %v1341 = vand.u32 2147483647, %v1268
      %vm1342 = vcmp.eq.f32.partialorder %v1341, 8.507059e+37
      %v1343 = vand.u32 %v1268, 2147483648
      %v1344 = vor.u32 1.1754944e-38, %v1343
      %v1345 = vsel %vm1342, %v1344, %v1340
      %v1346 = vmul.f32 1.0, %v1345
      %v1347 = vrcp.pop %v1269
      %v1348 = vmul.f32 %v1269, %v1347
      %v1349 = vsub.f32 1.0, %v1348
      %v1350 = vmul.f32 %v1347, %v1349
      %v1351 = vadd.f32 %v1347, %v1350
      %vm1352 = vweird.f32 %v1269
      %vm1353 = vweird.f32 %v1347
      %vm1354 = vmor %vm1352, %vm1353
      %v1355 = vsel %vm1354, %v1347, %v1351
      %v1356 = vand.u32 2147483647, %v1269
      %vm1357 = vcmp.eq.f32.partialorder %v1356, 8.507059e+37
      %v1358 = vand.u32 %v1269, 2147483648
      %v1359 = vor.u32 1.1754944e-38, %v1358
      %v1360 = vsel %vm1357, %v1359, %v1355
      %v1361 = vmul.f32 1.0, %v1360
      %v1362 = vrcp.pop %v1270
      %v1363 = vmul.f32 %v1270, %v1362
      %v1364 = vsub.f32 1.0, %v1363
      %v1365 = vmul.f32 %v1362, %v1364
      %v1366 = vadd.f32 %v1362, %v1365
      %vm1367 = vweird.f32 %v1270
      %vm1368 = vweird.f32 %v1362
      %vm1369 = vmor %vm1367, %vm1368
      %v1370 = vsel %vm1369, %v1362, %v1366
      %v1371 = vand.u32 2147483647, %v1270
      %vm1372 = vcmp.eq.f32.partialorder %v1371, 8.507059e+37
      %v1373 = vand.u32 %v1270, 2147483648
      %v1374 = vor.u32 1.1754944e-38, %v1373
      %v1375 = vsel %vm1372, %v1374, %v1370
      %v1376 = vmul.f32 1.0, %v1375
      %v1377 = vrcp.pop %v1271
      %v1378 = vmul.f32 %v1271, %v1377
      %v1379 = vsub.f32 1.0, %v1378
      %v1380 = vmul.f32 %v1377, %v1379
      %v1381 = vadd.f32 %v1377, %v1380
      %vm1382 = vweird.f32 %v1271
      %vm1383 = vweird.f32 %v1377
      %vm1384 = vmor %vm1382, %vm1383
      %v1385 = vsel %vm1384, %v1377, %v1381
      %v1386 = vand.u32 2147483647, %v1271
      %vm1387 = vcmp.eq.f32.partialorder %v1386, 8.507059e+37
      %v1388 = vand.u32 %v1271, 2147483648
      %v1389 = vor.u32 1.1754944e-38, %v1388
      %v1390 = vsel %vm1387, %v1389, %v1385
      %v1391 = vmul.f32 1.0, %v1390
      %v1392 = vmul.f32 %v1221, %v1286
      %v1393 = vmul.f32 %v1223, %v1301
      %v1394 = vmul.f32 %v1226, %v1316
      %v1395 = vmul.f32 %v1228, %v1331
      %v1396 = vmul.f32 %v1231, %v1346
      %v1397 = vmul.f32 %v1233, %v1361
      %v1398 = vmul.f32 %v1236, %v1376
      %v1399 = vmul.f32 %v1238, %v1391
      %v1400 = vld [vmem:[%s9] sm:$0xf]
      %v1401 = vld [vmem:[%s9 + $0x4] sm:$0xf]
      %v1402 = vld [vmem:[%s9 + $0x8] sm:$0xf]
      %v1403 = vld [vmem:[%s9 + $0xc] sm:$0xf]
      %v1404 = vld [vmem:[%s10] sm:$0x1]
      %v1406 = vperm.slane %v1404, 0
      %v1412 = vunpack.c.l.b16 %v1400
      %v1413 = vunpack.c.l.b16 %v1401
      %v1414 = vunpack.c.l.b16 %v1402
      %v1415 = vunpack.c.l.b16 %v1403
      %v1416 = vpack.c.b16 %v1413, %v1412
      %v1417 = vpack.c.b16 %v1415, %v1414
      %1420 = vmatpush.bf16.msra.mxu0 0
      %1421 = vmatpush.bf16.msra.mxu0 0
      %1422 = vmatpush.bf16.msra.mxu0 0
      %1423 = vmatpush.bf16.msra.mxu0 0
      %1424 = vmatpush.bf16.msra.mxu0 0
      %1425 = vmatpush.bf16.msra.mxu0 0
      %1426 = vmatpush.bf16.msra.mxu0 %v1417
      %1427 = vmatpush.bf16.msra.mxu0 %v1416
      %1428 = vmatmul.bf16.gmra.mxu0 %v991
      %v1429 = vpop.f32.mrf.mxu0
      %v1430 = vadd.f32 %v1406, %v1429
      %v1431 = vpop.f32.mrf.mxu0
      %v1432 = vadd.f32 %v1406, %v1431
      %1433 = vmatmul.bf16.gmra.mxu0 %v994
      %v1434 = vpop.f32.mrf.mxu0
      %v1435 = vadd.f32 %v1406, %v1434
      %v1436 = vpop.f32.mrf.mxu0
      %v1437 = vadd.f32 %v1406, %v1436
      %1438 = vmatmul.bf16.gmra.mxu0 %v997
      %v1439 = vpop.f32.mrf.mxu0
      %v1440 = vadd.f32 %v1406, %v1439
      %v1441 = vpop.f32.mrf.mxu0
      %v1442 = vadd.f32 %v1406, %v1441
      %1443 = vmatmul.bf16.gmra.mxu0 %v1000
      %v1444 = vpop.f32.mrf.mxu0
      %v1445 = vadd.f32 %v1406, %v1444
      %v1446 = vpop.f32.mrf.mxu0
      %v1447 = vadd.f32 %v1406, %v1446
      %1448 = vdwg.mxu0
      %v1449 = vld [vmem:[%s11] sm:$0x1]
      %v1451 = vperm.slane %v1449, 0
      %v1453 = vmul.f32 %v1430, %v1451
      %v1454 = vmul.f32 %v1432, %v1451
      %v1455 = vmul.f32 %v1435, %v1451
      %v1456 = vmul.f32 %v1437, %v1451
      %v1457 = vmul.f32 %v1440, %v1451
      %v1458 = vmul.f32 %v1442, %v1451
      %v1459 = vmul.f32 %v1445, %v1451
      %v1460 = vmul.f32 %v1447, %v1451
      %v1461 = vld [vmem:[%s12] sm:$0x1]
      %v1463 = vperm.slane %v1461, 0
      %v1465 = vadd.f32 %v1453, %v1463
      %v1466 = vadd.f32 %v1454, %v1463
      %v1467 = vadd.f32 %v1455, %v1463
      %v1468 = vadd.f32 %v1456, %v1463
      %v1469 = vadd.f32 %v1457, %v1463
      %v1470 = vadd.f32 %v1458, %v1463
      %v1471 = vadd.f32 %v1459, %v1463
      %v1472 = vadd.f32 %v1460, %v1463
      %v1473 = vld [vmem:[%s13] sm:$0x1]
      %v1475 = vperm.slane %v1473, 0
      %v1477 = vmul.f32 %v1430, %v1475
      %v1478 = vmul.f32 %v1432, %v1475
      %v1479 = vmul.f32 %v1435, %v1475
      %v1480 = vmul.f32 %v1437, %v1475
      %v1481 = vmul.f32 %v1440, %v1475
      %v1482 = vmul.f32 %v1442, %v1475
      %v1483 = vmul.f32 %v1445, %v1475
      %v1484 = vmul.f32 %v1447, %v1475
      %v1485 = vld [vmem:[%s14] sm:$0x1]
      %v1487 = vperm.slane %v1485, 0
      %v1489 = vadd.f32 %v1477, %v1487
      %v1490 = vadd.f32 %v1478, %v1487
      %v1491 = vadd.f32 %v1479, %v1487
      %v1492 = vadd.f32 %v1480, %v1487
      %v1493 = vadd.f32 %v1481, %v1487
      %v1494 = vadd.f32 %v1482, %v1487
      %v1495 = vadd.f32 %v1483, %v1487
      %v1496 = vadd.f32 %v1484, %v1487
      %v1497 = vpack.c.bf16 %v1184, %v1183
      %v1498 = vpack.c.bf16 %v1186, %v1185
      %v1499 = vpack.c.bf16 %v1188, %v1187
      %v1500 = vpack.c.bf16 %v1190, %v1189
      %v1501 = vpack.c.bf16 %v1466, %v1465
      %v1502 = vpack.c.bf16 %v1468, %v1467
      %v1503 = vpack.c.bf16 %v1470, %v1469
      %v1504 = vpack.c.bf16 %v1472, %v1471
      %v1506 = vsel %vm560, %v1497, 0
      %v1509 = vsel %vm560, %v1498, 0
      %v1512 = vsel %vm560, %v1499, 0
      %v1515 = vsel %vm560, %v1500, 0
      %v1518 = vsel %vm560, %v1501, 0
      %v1521 = vsel %vm560, %v1502, 0
      %v1524 = vsel %vm560, %v1503, 0
      %v1527 = vsel %vm560, %v1504, 0
      %1529 = vmatpush.bf16.xpose.msra.mxu0 0
      %1530 = vmatpush.bf16.xpose.msra.mxu0 0
      %1531 = vmatpush.bf16.xpose.msra.mxu0 0
      %1532 = vmatpush.bf16.xpose.msra.mxu0 0
      %1533 = vmatpush.bf16.xpose.msra.mxu0 %v1527
      %1534 = vmatpush.bf16.xpose.msra.mxu0 %v1524
      %1535 = vmatpush.bf16.xpose.msra.mxu0 %v1521
      %1536 = vmatpush.bf16.xpose.msra.mxu0 %v1518
      %1537 = vmatmul.bf16.gmra.mxu0 %v1506
      %v1538 = vpop.f32.mrf.mxu0
      %v1539 = vadd.f32 0.0, %v1538
      %v1540 = vpop.f32.mrf.mxu0
      %v1541 = vadd.f32 0.0, %v1540
      %1542 = vmatmul.bf16.gmra.mxu0 %v1509
      %v1543 = vpop.f32.mrf.mxu0
      %v1544 = vadd.f32 0.0, %v1543
      %v1545 = vpop.f32.mrf.mxu0
      %v1546 = vadd.f32 0.0, %v1545
      %1547 = vmatmul.bf16.gmra.mxu0 %v1512
      %v1548 = vpop.f32.mrf.mxu0
      %v1549 = vadd.f32 0.0, %v1548
      %v1550 = vpop.f32.mrf.mxu0
      %v1551 = vadd.f32 0.0, %v1550
      %1552 = vmatmul.bf16.gmra.mxu0 %v1515
      %v1553 = vpop.f32.mrf.mxu0
      %v1554 = vadd.f32 0.0, %v1553
      %v1555 = vpop.f32.mrf.mxu0
      %v1556 = vadd.f32 0.0, %v1555
      %1557 = vdwg.mxu0
      %v1558 = vmul.f32 %v1539, 0.015625
      %v1559 = vmul.f32 %v1541, 0.015625
      %v1560 = vmul.f32 %v1544, 0.015625
      %v1561 = vmul.f32 %v1546, 0.015625
      %v1562 = vmul.f32 %v1549, 0.015625
      %v1563 = vmul.f32 %v1551, 0.015625
      %v1564 = vmul.f32 %v1554, 0.015625
      %v1565 = vmul.f32 %v1556, 0.015625
      %v1566 = vmax.f32 %v1558, 0.0
      %v1567 = vmax.f32 %v1559, 0.0
      %v1568 = vmax.f32 %v1560, 0.0
      %v1569 = vmax.f32 %v1561, 0.0
      %v1570 = vmax.f32 %v1562, 0.0
      %v1571 = vmax.f32 %v1563, 0.0
      %v1572 = vmax.f32 %v1564, 0.0
      %v1573 = vmax.f32 %v1565, 0.0
      %v1574 = vmul.f32 %v1566, %v1566
      %v1575 = vmul.f32 %v1567, %v1567
      %v1576 = vmul.f32 %v1568, %v1568
      %v1577 = vmul.f32 %v1569, %v1569
      %v1578 = vmul.f32 %v1570, %v1570
      %v1579 = vmul.f32 %v1571, %v1571
      %v1580 = vmul.f32 %v1572, %v1572
      %v1581 = vmul.f32 %v1573, %v1573
      %v1582 = vpack.c.bf16 %v1575, %v1574
      %v1583 = vpack.c.bf16 %v1577, %v1576
      %v1584 = vpack.c.bf16 %v1579, %v1578
      %v1585 = vpack.c.bf16 %v1581, %v1580
      %v1586 = vpack.c.bf16 %v1490, %v1489
      %v1587 = vpack.c.bf16 %v1492, %v1491
      %v1588 = vpack.c.bf16 %v1494, %v1493
      %v1589 = vpack.c.bf16 %v1496, %v1495
      %vm1590 = vcmask 523264
      %v1592 = vsel %vm1590, %v1582, 0
      %v1595 = vsel %vm1590, %v1583, 0
      %v1598 = vsel %vm1590, %v1584, 0
      %v1601 = vsel %vm1590, %v1585, 0
      %1603 = vmatpush.bf16.msra.mxu0 0
      %1604 = vmatpush.bf16.msra.mxu0 0
      %1605 = vmatpush.bf16.msra.mxu0 0
      %1606 = vmatpush.bf16.msra.mxu0 0
      %1607 = vmatpush.bf16.msra.mxu0 %v1589
      %1608 = vmatpush.bf16.msra.mxu0 %v1588
      %1609 = vmatpush.bf16.msra.mxu0 %v1587
      %1610 = vmatpush.bf16.msra.mxu0 %v1586
      %1611 = vmatmul.bf16.gmra.mxu0 %v1592
      %v1612 = vpop.f32.mrf.mxu0
      %v1613 = vadd.f32 0.0, %v1612
      %v1614 = vpop.f32.mrf.mxu0
      %v1615 = vadd.f32 0.0, %v1614
      %1616 = vmatmul.bf16.gmra.mxu0 %v1595
      %v1617 = vpop.f32.mrf.mxu0
      %v1618 = vadd.f32 0.0, %v1617
      %v1619 = vpop.f32.mrf.mxu0
      %v1620 = vadd.f32 0.0, %v1619
      %1621 = vmatmul.bf16.gmra.mxu0 %v1598
      %v1622 = vpop.f32.mrf.mxu0
      %v1623 = vadd.f32 0.0, %v1622
      %v1624 = vpop.f32.mrf.mxu0
      %v1625 = vadd.f32 0.0, %v1624
      %1626 = vmatmul.bf16.gmra.mxu0 %v1601
      %v1627 = vpop.f32.mrf.mxu0
      %v1628 = vadd.f32 0.0, %v1627
      %v1629 = vpop.f32.mrf.mxu0
      %v1630 = vadd.f32 0.0, %v1629
      %1631 = vdwg.mxu0
      %v1632 = vmul.f32 %v1613, %v1392
      %v1633 = vmul.f32 %v1615, %v1393
      %v1634 = vmul.f32 %v1618, %v1394
      %v1635 = vmul.f32 %v1620, %v1395
      %v1636 = vmul.f32 %v1623, %v1396
      %v1637 = vmul.f32 %v1625, %v1397
      %v1638 = vmul.f32 %v1628, %v1398
      %v1639 = vmul.f32 %v1630, %v1399
      %v1640 = vpack.c.bf16 %v1633, %v1632
      %v1641 = vpack.c.bf16 %v1635, %v1634
      %v1642 = vpack.c.bf16 %v1637, %v1636
      %v1643 = vpack.c.bf16 %v1639, %v1638
      %v1644 = vld [vmem:[%s15] sm:$0xf]
      %v1645 = vld [vmem:[%s15 + $0x4] sm:$0xf]
      %v1646 = vld [vmem:[%s15 + $0x8] sm:$0xf]
      %v1647 = vld [vmem:[%s15 + $0xc] sm:$0xf]
      %v1648 = vld [vmem:[%s16] sm:$0x1]
      %v1650 = vperm.slane %v1648, 0
      %v1656 = vunpack.c.l.b16 %v1644
      %v1657 = vunpack.c.l.b16 %v1645
      %v1658 = vunpack.c.l.b16 %v1646
      %v1659 = vunpack.c.l.b16 %v1647
      %v1660 = vpack.c.b16 %v1657, %v1656
      %v1661 = vpack.c.b16 %v1659, %v1658
      %v1665 = vsel %vm560, %v1640, 0
      %v1668 = vsel %vm560, %v1641, 0
      %v1671 = vsel %vm560, %v1642, 0
      %v1674 = vsel %vm560, %v1643, 0
      %1676 = vmatpush.bf16.msra.mxu0 0
      %1677 = vmatpush.bf16.msra.mxu0 0
      %1678 = vmatpush.bf16.msra.mxu0 0
      %1679 = vmatpush.bf16.msra.mxu0 0
      %1680 = vmatpush.bf16.msra.mxu0 0
      %1681 = vmatpush.bf16.msra.mxu0 0
      %1682 = vmatpush.bf16.msra.mxu0 %v1661
      %1683 = vmatpush.bf16.msra.mxu0 %v1660
      %1684 = vmatmul.bf16.gmra.mxu0 %v1665
      %v1685 = vpop.f32.mrf.mxu0
      %v1686 = vadd.f32 %v1650, %v1685
      %v1687 = vpop.f32.mrf.mxu0
      %v1688 = vadd.f32 %v1650, %v1687
      %1689 = vmatmul.bf16.gmra.mxu0 %v1668
      %v1690 = vpop.f32.mrf.mxu0
      %v1691 = vadd.f32 %v1650, %v1690
      %v1692 = vpop.f32.mrf.mxu0
      %v1693 = vadd.f32 %v1650, %v1692
      %1694 = vmatmul.bf16.gmra.mxu0 %v1671
      %v1695 = vpop.f32.mrf.mxu0
      %v1696 = vadd.f32 %v1650, %v1695
      %v1697 = vpop.f32.mrf.mxu0
      %v1698 = vadd.f32 %v1650, %v1697
      %1699 = vmatmul.bf16.gmra.mxu0 %v1674
      %v1700 = vpop.f32.mrf.mxu0
      %v1701 = vadd.f32 %v1650, %v1700
      %v1702 = vpop.f32.mrf.mxu0
      %v1703 = vadd.f32 %v1650, %v1702
      %1704 = vdwg.mxu0
      %v1705 = vadd.f32 %v550, %v758
      %v1706 = vadd.f32 %v551, %v759
      %v1707 = vadd.f32 %v552, %v760
      %v1708 = vadd.f32 %v553, %v761
      %v1709 = vadd.f32 %v554, %v762
      %v1710 = vadd.f32 %v555, %v763
      %v1711 = vadd.f32 %v556, %v764
      %v1712 = vadd.f32 %v557, %v765
      %v1713 = vadd.f32 %v1705, %v1686
      %v1714 = vadd.f32 %v1706, %v1688
      %v1715 = vadd.f32 %v1707, %v1691
      %v1716 = vadd.f32 %v1708, %v1693
      %v1717 = vadd.f32 %v1709, %v1696
      %v1718 = vadd.f32 %v1710, %v1698
      %v1719 = vadd.f32 %v1711, %v1701
      %v1720 = vadd.f32 %v1712, %v1703
      %1721 = vst.msk [vmem:[%s548] sm:$0xff] %vm560, %v1713
      %1722 = vst.msk [vmem:[%s548 + $0x8] sm:$0xff] %vm560, %v1714
      %1723 = vst.msk [vmem:[%s548 + $0x10] sm:$0xff] %vm560, %v1715
      %1724 = vst.msk [vmem:[%s548 + $0x18] sm:$0xff] %vm560, %v1716
      %1725 = vst.msk [vmem:[%s548 + $0x20] sm:$0xff] %vm560, %v1717
      %1726 = vst.msk [vmem:[%s548 + $0x28] sm:$0xff] %vm560, %v1718
      %1727 = vst.msk [vmem:[%s548 + $0x30] sm:$0xff] %vm560, %v1719
      %1728 = vst.msk [vmem:[%s548 + $0x38] sm:$0xff] %vm560, %v1720
      %p1729 = scmp.lt.s32.totalorder %s28, 1
      %s1730 = scalar_select %p1729, %s28, 1
      %s1731 = smul.addr %s1730, 8
      %s1732 = smul.addr %s1731, 8
      %s1733 = scalar_lea.vmem %s17, %s1732
      // Predicated region
      $region89: #{tpu_custom_call.1} parent=87 // pred_check
        %p1734 = pneg %p408
      $region90: #{tpu_custom_call.1} parent=87 // pred_check_branch
        %1736 = sbr.rel (%p1734) target = $region92
      $region91: #{tpu_custom_call.1} parent=87 // pred_region
        _
      $region92: #{tpu_custom_call.1} parent=87 // pred_fallthru
        _
    $region88: #{tpu_custom_call.1} parent=5 // pred_fallthru
      _
    %p1737 = scmp.le.s32.totalorder 2, %s23
    // Predicated region
    $region93: #{tpu_custom_call.1} parent=5 // pred_check
      %p1738 = pneg %p1737
    $region94: #{tpu_custom_call.1} parent=5 // pred_check_branch
      %1740 = sbr.rel (%p1738) target = $region96
    $region95: #{tpu_custom_call.1} parent=5 // pred_region
      %s1741 = ssub.s32 %s23, 2
      // Predicated region
      $region97: #{tpu_custom_call.1} parent=95 // pred_check
        %p1742 = pneg %p414
      $region98: #{tpu_custom_call.1} parent=95 // pred_check_branch
        %1744 = sbr.rel (%p1742) target = $region100
      $region99: #{tpu_custom_call.1} parent=95 // pred_region
        %p1745 = scmp.lt.s32.totalorder %s29, 1
        %s1746 = scalar_select %p1745, %s29, 1
        %s1747 = smul.addr %s1746, 8
        %s1748 = smul.addr %s1747, 8
        %s1749 = scalar_lea.vmem %s17, %s1748
      $region100: #{tpu_custom_call.1} parent=95 // pred_fallthru
        _
    $region96: #{tpu_custom_call.1} parent=5 // pred_fallthru
      _
  $region6: #{tpu_custom_call.1} parent=0 // loop_footer
    %s27 = sadd.s32 1, %s23
  $region7: #{tpu_custom_call.1} parent=0 // loop_footer_branch
    %22 = sbr.rel target = $region3
  $region8: #{tpu_custom_call.1} parent=0 // loop_exit
    _

</llo_original>
